<compile_context>
chip_gen: v6e
topology: v6e:2x2x1
jax: 0.10.0
libtpu: 0.0.40
codegen_flags: <defaults>
</compile_context>

<pallas_src>
import functools

import jax
import jax.numpy as jnp
import numpy as np
from jax.experimental import pallas as pl
from jax.experimental.pallas import tpu as pltpu


def bilinear_matrix(out_size: int, in_size: int) -> jnp.ndarray:
    """Interpolation matrix M (out_size, in_size) for align_corners=True bilinear."""
    if out_size == 1:
        src = jnp.zeros((1,), jnp.float32)
    else:
        src = jnp.arange(out_size, dtype=jnp.float32) * (in_size - 1) / (out_size - 1)
    i0 = jnp.clip(jnp.floor(src).astype(jnp.int32), 0, in_size - 1)
    i1 = jnp.clip(i0 + 1, 0, in_size - 1)
    w1 = src - i0.astype(jnp.float32)
    w0 = 1.0 - w1
    return (w0[:, None] * jax.nn.one_hot(i0, in_size, dtype=jnp.float32)
            + w1[:, None] * jax.nn.one_hot(i1, in_size, dtype=jnp.float32))


def bilin_conv_upsampling(x, dw_weight, pw_weight, up_size, kernel_size):
    """x: (N, C, Hin, Win) f32; dw_weight: (C, k, k); pw_weight: (Cout, C)."""
    n, c, h_in, w_in = x.shape
    k = kernel_size
    c_out = pw_weight.shape[0]
    h_out, w_out = up_size
    h_up = h_out + (k - 1)
    w_up = w_out + (k - 1)
    co_ho = c_out * h_out

    # ---- wrapper-side precompute (weight/shape only, batch-independent) ----
    wh = bilinear_matrix(h_up, h_in)                       # (Hup, Hin)
    ww = bilinear_matrix(w_up, w_in)                       # (Wup, Win)
    # Row-shifted H-interp matrices per depthwise kernel row a.
    wh_sh = jnp.stack([wh[a:a + h_out] for a in range(k)], axis=0)   # (k, Hout, Hin)
    # Fold depthwise row weights and the 1x1 pointwise into the H matrices:
    #   W_b[co, h, ci, hin] = sum_a pw[co,ci] * dw[ci,a,b] * wh[a+h, hin]
    pw = pw_weight.astype(jnp.float32)
    dw = dw_weight.astype(jnp.float32)
    w_fold = jnp.einsum('oc,cab,ahi->bohci', pw, dw, wh_sh)          # (k, Cout, Hout, C, Hin)
    # Stack the k per-column-shift matrices along M: one MXU operand for all of them.
    w_all = w_fold.reshape(k, co_ho, c * h_in).reshape(k * co_ho, c * h_in)
    # Column-shifted, pre-transposed W-interp slices: wwt_b[b, win, w] = ww[b+w, win].
    wwt_b = jnp.stack([ww[b:b + w_out].T for b in range(k)], axis=0)  # (k, Win, Wout)
    # Channel-stacked input (free XLA reshape): row index = ci*Hin + hin.
    x_stacked = x.reshape(n, c * h_in, w_in)

    def kernel(x_ref, wall_ref, wwt_ref, o_ref):
        # x_ref:    (1, C*Hin, Win)        VMEM
        # wall_ref: (k*Cout*Hout, C*Hin)   VMEM
        # wwt_ref:  (k, Win, Wout)         VMEM
        # o_ref:    (1, Cout*Hout, Wout)   VMEM (NCHW row order -> free reshape outside)
        x2d = x_ref[0]                                     # (C*Hin, Win)
        # One stacked MXU matmul covering all k column shifts (M = k*Cout*Hout).
        t_all = jnp.dot(wall_ref[...], x2d,
                        preferred_element_type=jnp.float32)  # (k*Cout*Hout, Win)
        acc = jnp.zeros((co_ho, w_out), jnp.float32)
        for b in range(k):
            # Sublane-aligned static row slice (offset multiple of 8), then one
            # (Cout*Hout, Win) @ (Win, Wout) MXU matmul per column shift.
            t_b = t_all[b * co_ho:(b + 1) * co_ho, :]
            acc = acc + jnp.dot(t_b, wwt_ref[b],
                                preferred_element_type=jnp.float32)
        o_ref[0] = acc.astype(o_ref.dtype)

    out_flat = pl.pallas_call(
        kernel,
        out_shape=jax.ShapeDtypeStruct((n, co_ho, w_out), x.dtype),
        grid_spec=pltpu.PrefetchScalarGridSpec(
            num_scalar_prefetch=0,
            grid=(n,),
            in_specs=[
                pl.BlockSpec((1, c * h_in, w_in), lambda i: (i, 0, 0)),
                pl.BlockSpec((k * co_ho, c * h_in), lambda i: (0, 0)),
                pl.BlockSpec((k, w_in, w_out), lambda i: (0, 0, 0)),
            ],
            out_specs=pl.BlockSpec((1, co_ho, w_out), lambda i: (i, 0, 0)),
        ),
        compiler_params=pltpu.CompilerParams(
            dimension_semantics=("parallel",)),
    )(x_stacked, w_all, wwt_b)
    # Free XLA reshape back to NCHW (split of the major output dim).
    return out_flat.reshape(n, c_out, h_out, w_out)


def reference(x, dw_weight, pw_weight, up_size, kernel_size):
    """Pure-JAX reference matching PyTorch semantics (for correctness check)."""
    n, c, h_in, w_in = x.shape
    k = kernel_size
    h_up = up_size[0] + (k - 1)
    w_up = up_size[1] + (k - 1)
    h_out, w_out = up_size
    wh = bilinear_matrix(h_up, h_in)
    ww = bilinear_matrix(w_up, w_in)
    up = jnp.einsum('uh,nchw->ncuw', wh, x)
    up = jnp.einsum('ncuw,vw->ncuv', up, ww)
    dw_out = jnp.zeros((n, c, h_out, w_out), jnp.float32)
    for a in range(k):
        for b in range(k):
            dw_out = dw_out + dw_weight[None, :, a, b, None, None] * up[:, :, a:a + h_out, b:b + w_out]
    return jnp.einsum('oc,nchw->nohw', pw_weight, dw_out)


if __name__ == "__main__":
    # Module config (separable=True, bias=False):
    in_channels = 4
    out_channels = 8
    kernel_size = 3
    up_size = (32, 32)

    # Deterministic example input (NCHW) and synthetic parameters.
    key = jax.random.PRNGKey(0)
    kx, kd, kp = jax.random.split(key, 3)
    x = jax.random.normal(kx, (2, in_channels, 16, 16), dtype=jnp.float32)
    # depthwise Conv2d(C, C, groups=C, k, bias=False) -> weight (C, 1, k, k); stored as (C, k, k)
    dw_weight = 0.2 * jax.random.normal(kd, (in_channels, kernel_size, kernel_size), dtype=jnp.float32)
    # pointwise Conv2d(C, Cout, 1, bias=False) -> weight (Cout, C, 1, 1); stored as (Cout, C)
    pw_weight = 0.2 * jax.random.normal(kp, (out_channels, in_channels), dtype=jnp.float32)

    run = jax.jit(functools.partial(bilin_conv_upsampling,
                                    up_size=up_size, kernel_size=kernel_size))
    out = run(x, dw_weight, pw_weight)
    out = jax.block_until_ready(out)

    ref = reference(x, dw_weight, pw_weight, up_size, kernel_size)
    assert out.shape == (2, out_channels, up_size[0], up_size[1]), out.shape
    np.testing.assert_allclose(np.asarray(out), np.asarray(ref), rtol=1e-4, atol=1e-4)

    print("KERNEL_OK")
</pallas_src>

<mosaic_0001>
module attributes {stable_mosaic.version = 11 : i64} {
  func.func @kernel(%arg0: i32, %arg1: memref<1x64x16xf32, #tpu.memory_space<vmem>>, %arg2: memref<768x64xf32, #tpu.memory_space<vmem>>, %arg3: memref<3x16x32xf32, #tpu.memory_space<vmem>>, %arg4: memref<1x256x32xf32, #tpu.memory_space<vmem>>) attributes {dimension_semantics = [#tpu.dimension_semantics<parallel>], iteration_bounds = array<i64: 2>, scalar_prefetch = 0 : i64, scratch_operands = 0 : i64, tpu.core_type = #tpu.core_type<tc>, window_params = [{transform_indices = @transform_0, window_bounds = array<i64: 1, 64, 16>}, {pipeline_mode = #tpu.pipeline_mode<synchronous>, transform_indices = @transform_1, window_bounds = array<i64: 768, 64>}, {pipeline_mode = #tpu.pipeline_mode<synchronous>, transform_indices = @transform_2, window_bounds = array<i64: 3, 16, 32>}, {transform_indices = @transform_3, window_bounds = array<i64: 1, 256, 32>}]} {
    %c0 = arith.constant 0 : index
    %c0_0 = arith.constant 0 : index
    %c0_1 = arith.constant 0 : index
    %0 = vector.load %arg1[%c0, %c0_0, %c0_1] : memref<1x64x16xf32, #tpu.memory_space<vmem>>, vector<1x64x16xf32>
    %1 = vector.shape_cast %0 : vector<1x64x16xf32> to vector<64x16xf32>
    %c0_2 = arith.constant 0 : index
    %c0_3 = arith.constant 0 : index
    %2 = vector.load %arg2[%c0_2, %c0_3] : memref<768x64xf32, #tpu.memory_space<vmem>>, vector<768x64xf32>
    %cst = arith.constant dense<0.000000e+00> : vector<768x16xf32>
    %3 = tpu.matmul %2, %1, %cst {dimension_numbers = #tpu.dot_dimension_numbers<[1], [0], [0], [1], [0, 0, 1, 1], [], []>} : vector<768x64xf32>, vector<64x16xf32>, vector<768x16xf32> -> vector<768x16xf32>
    %cst_4 = arith.constant 0.000000e+00 : f32
    %4 = vector.broadcast %cst_4 : f32 to vector<256x32xf32>
    %5 = vector.extract_strided_slice %3 {offsets = [0, 0], sizes = [256, 16], strides = [1, 1]} : vector<768x16xf32> to vector<256x16xf32>
    %c0_5 = arith.constant 0 : index
    %c0_6 = arith.constant 0 : index
    %c0_7 = arith.constant 0 : index
    %6 = vector.load %arg3[%c0_5, %c0_6, %c0_7] : memref<3x16x32xf32, #tpu.memory_space<vmem>>, vector<1x16x32xf32>
    %7 = vector.shape_cast %6 : vector<1x16x32xf32> to vector<16x32xf32>
    %cst_8 = arith.constant dense<0.000000e+00> : vector<256x32xf32>
    %8 = tpu.matmul %5, %7, %cst_8 {dimension_numbers = #tpu.dot_dimension_numbers<[1], [0], [0], [1], [0, 0, 1, 1], [], []>} : vector<256x16xf32>, vector<16x32xf32>, vector<256x32xf32> -> vector<256x32xf32>
    %9 = arith.addf %4, %8 : vector<256x32xf32>
    %10 = vector.extract_strided_slice %3 {offsets = [256, 0], sizes = [256, 16], strides = [1, 1]} : vector<768x16xf32> to vector<256x16xf32>
    %c1 = arith.constant 1 : index
    %c0_9 = arith.constant 0 : index
    %c0_10 = arith.constant 0 : index
    %11 = vector.load %arg3[%c1, %c0_9, %c0_10] : memref<3x16x32xf32, #tpu.memory_space<vmem>>, vector<1x16x32xf32>
    %12 = vector.shape_cast %11 : vector<1x16x32xf32> to vector<16x32xf32>
    %cst_11 = arith.constant dense<0.000000e+00> : vector<256x32xf32>
    %13 = tpu.matmul %10, %12, %cst_11 {dimension_numbers = #tpu.dot_dimension_numbers<[1], [0], [0], [1], [0, 0, 1, 1], [], []>} : vector<256x16xf32>, vector<16x32xf32>, vector<256x32xf32> -> vector<256x32xf32>
    %14 = arith.addf %9, %13 : vector<256x32xf32>
    %15 = vector.extract_strided_slice %3 {offsets = [512, 0], sizes = [256, 16], strides = [1, 1]} : vector<768x16xf32> to vector<256x16xf32>
    %c2 = arith.constant 2 : index
    %c0_12 = arith.constant 0 : index
    %c0_13 = arith.constant 0 : index
    %16 = vector.load %arg3[%c2, %c0_12, %c0_13] : memref<3x16x32xf32, #tpu.memory_space<vmem>>, vector<1x16x32xf32>
    %17 = vector.shape_cast %16 : vector<1x16x32xf32> to vector<16x32xf32>
    %cst_14 = arith.constant dense<0.000000e+00> : vector<256x32xf32>
    %18 = tpu.matmul %15, %17, %cst_14 {dimension_numbers = #tpu.dot_dimension_numbers<[1], [0], [0], [1], [0, 0, 1, 1], [], []>} : vector<256x16xf32>, vector<16x32xf32>, vector<256x32xf32> -> vector<256x32xf32>
    %19 = arith.addf %14, %18 : vector<256x32xf32>
    %c0_15 = arith.constant 0 : index
    %c0_16 = arith.constant 0 : index
    %c0_17 = arith.constant 0 : index
    %20 = vector.load %arg4[%c0_15, %c0_16, %c0_17] : memref<1x256x32xf32, #tpu.memory_space<vmem>>, vector<1x256x32xf32>
    %21 = vector.shape_cast %20 : vector<1x256x32xf32> to vector<256x32xf32>
    %22 = vector.shape_cast %19 : vector<256x32xf32> to vector<1x256x32xf32>
    tpu.vector_store %arg4[%c0_15, %c0_16, %c0_17], %22 {strides = array<i32>} : memref<1x256x32xf32, #tpu.memory_space<vmem>>, vector<1x256x32xf32>,
    return
  }
  func.func @transform_0(%arg0: i32) -> (i32, i32, i32) {
    %c0_i32 = arith.constant 0 : i32
    %c0_i32_0 = arith.constant 0 : i32
    %c0_i32_1 = arith.constant 0 : i32
    return %arg0, %c0_i32, %c0_i32_0 : i32, i32, i32
  }
  func.func @transform_1(%arg0: i32) -> (i32, i32) {
    %c0_i32 = arith.constant 0 : i32
    %c0_i32_0 = arith.constant 0 : i32
    %c0_i32_1 = arith.constant 0 : i32
    return %c0_i32, %c0_i32_0 : i32, i32
  }
  func.func @transform_2(%arg0: i32) -> (i32, i32, i32) {
    %c0_i32 = arith.constant 0 : i32
    %c0_i32_0 = arith.constant 0 : i32
    %c0_i32_1 = arith.constant 0 : i32
    %c0_i32_2 = arith.constant 0 : i32
    return %c0_i32, %c0_i32_0, %c0_i32_1 : i32, i32, i32
  }
  func.func @transform_3(%arg0: i32) -> (i32, i32, i32) {
    %c0_i32 = arith.constant 0 : i32
    %c0_i32_0 = arith.constant 0 : i32
    %c0_i32_1 = arith.constant 0 : i32
    return %arg0, %c0_i32, %c0_i32_0 : i32, i32, i32
  }
}

</mosaic_0001>

<llo_original>
// kernel: bilin_conv_upsampling.1
$region0: #{bilin_conv_upsampling.1}
  #allocation0 [shape = 'u32[]', space=smem, size = 0x4, offset = 0x4, fixed_abs, tag = 'smem constant byte address 0x4 - core index']
  #allocation1 [shape = 'u32[144,128]{1,0:T(1,128)}', space=vmem, size = 0x12000, scoped, tag = 'internal scratch']
  %s0 = inlined_call_operand.vmem [shape: f32[2,64,16], index: 0, kind: input, shape index: {}]
  %s1 = inlined_call_operand.vmem [shape: f32[768,64], index: 1, kind: input, shape index: {}]
  %s2 = inlined_call_operand.vmem [shape: f32[3,16,32], index: 2, kind: input, shape index: {}]
  %s3 = inlined_call_operand.hbm [shape: f32[2,256,32], index: 3, kind: output, shape index: {}]
  %s4 = sld [smem:[#allocation0]]
  $region45: #{bilin_conv_upsampling.1} parent=0
    _
  %s6 = ssub.s32 1, %s4
  %s7 = scalar_select 0, %s6, %s4
  $region1: #{bilin_conv_upsampling.1} parent=0
    #allocation2 [shape = 'u8[262144]{0}', space=vmem, size = 0x40000, scoped, tag = 'output window, operand 0']
    #allocation3 [shape = 's32[2]{0}', space=sflag, size = 0x8, scoped, tag = 'scoped memory for bilin_conv_upsampling.1']
    %8 = vsyncpa [#allocation3], 0
    %s9 = scalar_lea.sflag [#allocation3], 1
    %10 = vsyncpa %s9, 0
    loop: start=0, step=1, limit=4
    $region2: #{bilin_conv_upsampling.1} parent=1 // loop_pre_header
      _
    $region3: #{bilin_conv_upsampling.1} parent=1 // loop_header
      %s12 = sphi 0, %s16
      %p13 = scmp.ge.s32.totalorder %s12, 4
      %s22 = sphi 0, %s24
      %s25 = sphi 0, %s22
      %s26 = sphi 0, %s25
      %s42 = sphi 0, %s26
      %s46 = sphi 0, %s46
      %s48 = sphi 0, %s46
      %s49 = sphi 0, %s48
      %s63 = sphi 0, %s49
      %s67 = sphi 0, %s67
      %s69 = sphi 0, %s67
      %s70 = sphi 0, %s69
      %s84 = sphi 0, %s70
      %s90 = sphi 0, %s92
      %s93 = sphi 0, %s90
      %s94 = sphi 0, %s93
      %s110 = sphi 0, %s94
    $region4: #{bilin_conv_upsampling.1} parent=1 // loop_header_branch
      %15 = sbr.rel (%p13) target = $region8
    $region5: #{bilin_conv_upsampling.1} parent=1 // loop_body
      %s17 = ssub.s32 %s12, 1
      %s18 = ssub.s32 %s12, 2
      %s19 = sadd.s32 %s12, 1
      %s20 = ssub.s32 %s12, %s19
      %p21 = scmp.eq.s32.totalorder %s20, 0
      %s23 = sadd.s32 %s22, 1
      %s24 = scalar_select %p21, %s22, %s23
      %p27 = pneg %p21
      %p28 = scmp.eq.s32.totalorder %s12, 1
      %p29 = por %p27, %p28
      %p30 = scmp.ne.s32.totalorder %s22, %s25
      %p31 = scmp.eq.s32.totalorder %s12, 0
      %p32 = por %p30, %p31
      %p33 = scmp.ne.s32.totalorder %s22, %s25
      %p34 = scmp.eq.s32.totalorder %s17, 1
      %p35 = por %p33, %p34
      %p36 = scmp.ne.s32.totalorder %s25, %s26
      %p37 = scmp.eq.s32.totalorder %s17, 0
      %p38 = por %p36, %p37
      %p39 = scmp.ne.s32.totalorder %s25, %s26
      %p40 = scmp.eq.s32.totalorder %s18, 1
      %p41 = por %p39, %p40
      %p43 = scmp.ne.s32.totalorder %s26, %s42
      %p44 = scmp.eq.s32.totalorder %s18, 0
      %p45 = por %p43, %p44
      %s47 = sadd.s32 %s46, 1
      %p50 = scmp.eq.s32.totalorder %s12, 1
      %p51 = scmp.ne.s32.totalorder %s46, %s48
      %p52 = scmp.eq.s32.totalorder %s12, 0
      %p53 = por %p51, %p52
      %p54 = scmp.ne.s32.totalorder %s46, %s48
      %p55 = scmp.eq.s32.totalorder %s17, 1
      %p56 = por %p54, %p55
      %p57 = scmp.ne.s32.totalorder %s48, %s49
      %p58 = scmp.eq.s32.totalorder %s17, 0
      %p59 = por %p57, %p58
      %p60 = scmp.ne.s32.totalorder %s48, %s49
      %p61 = scmp.eq.s32.totalorder %s18, 1
      %p62 = por %p60, %p61
      %p64 = scmp.ne.s32.totalorder %s49, %s63
      %p65 = scmp.eq.s32.totalorder %s18, 0
      %p66 = por %p64, %p65
      %s68 = sadd.s32 %s67, 1
      %p71 = scmp.eq.s32.totalorder %s12, 1
      %p72 = scmp.ne.s32.totalorder %s67, %s69
      %p73 = scmp.eq.s32.totalorder %s12, 0
      %p74 = por %p72, %p73
      %p75 = scmp.ne.s32.totalorder %s67, %s69
      %p76 = scmp.eq.s32.totalorder %s17, 1
      %p77 = por %p75, %p76
      %p78 = scmp.ne.s32.totalorder %s69, %s70
      %p79 = scmp.eq.s32.totalorder %s17, 0
      %p80 = por %p78, %p79
      %p81 = scmp.ne.s32.totalorder %s69, %s70
      %p82 = scmp.eq.s32.totalorder %s18, 1
      %p83 = por %p81, %p82
      %p85 = scmp.ne.s32.totalorder %s70, %s84
      %p86 = scmp.eq.s32.totalorder %s18, 0
      %p87 = por %p85, %p86
      %s88 = ssub.s32 %s12, %s19
      %p89 = scmp.eq.s32.totalorder %s88, 0
      %s91 = sadd.s32 %s90, 1
      %s92 = scalar_select %p89, %s90, %s91
      %p95 = pneg %p89
      %p96 = scmp.eq.s32.totalorder %s12, 1
      %p97 = por %p95, %p96
      %p98 = scmp.ne.s32.totalorder %s90, %s93
      %p99 = scmp.eq.s32.totalorder %s12, 0
      %p100 = por %p98, %p99
      %p101 = scmp.ne.s32.totalorder %s90, %s93
      %p102 = scmp.eq.s32.totalorder %s17, 1
      %p103 = por %p101, %p102
      %p104 = scmp.ne.s32.totalorder %s93, %s94
      %p105 = scmp.eq.s32.totalorder %s17, 0
      %p106 = por %p104, %p105
      %p107 = scmp.ne.s32.totalorder %s93, %s94
      %p108 = scmp.eq.s32.totalorder %s18, 1
      %p109 = por %p107, %p108
      %p111 = scmp.ne.s32.totalorder %s94, %s110
      %p112 = scmp.eq.s32.totalorder %s18, 0
      %p113 = por %p111, %p112
      %p114 = scmp.le.s32.totalorder 1, %s12
      %p115 = scmp.lt.s32.totalorder %s12, 3
      %p116 = pnand %p114, %p115
      %p117 = pneg %p116
      // Predicated region
      $region9: #{bilin_conv_upsampling.1} parent=5 // pred_check
        _
      $region10: #{bilin_conv_upsampling.1} parent=5 // pred_check_branch
        %119 = sbr.rel (%p116) target = $region12
      $region11: #{bilin_conv_upsampling.1} parent=5 // pred_region
        %s120 = ssub.s32 %s12, 1
        // Predicated region
        $region13: #{bilin_conv_upsampling.1} parent=11 // pred_check
          %p121 = pneg %p59
        $region14: #{bilin_conv_upsampling.1} parent=11 // pred_check_branch
          %123 = sbr.rel (%p121) target = $region16
        $region15: #{bilin_conv_upsampling.1} parent=11 // pred_region
          _
        $region16: #{bilin_conv_upsampling.1} parent=11 // pred_fallthru
          _
        // Predicated region
        $region17: #{bilin_conv_upsampling.1} parent=11 // pred_check
          %p124 = pneg %p80
        $region18: #{bilin_conv_upsampling.1} parent=11 // pred_check_branch
          %126 = sbr.rel (%p124) target = $region20
        $region19: #{bilin_conv_upsampling.1} parent=11 // pred_region
          _
        $region20: #{bilin_conv_upsampling.1} parent=11 // pred_fallthru
          _
      $region12: #{bilin_conv_upsampling.1} parent=5 // pred_fallthru
        _
      %p127 = scmp.lt.s32.totalorder %s12, 2
      // Predicated region
      $region21: #{bilin_conv_upsampling.1} parent=5 // pred_check
        %p128 = pneg %p127
      $region22: #{bilin_conv_upsampling.1} parent=5 // pred_check_branch
        %130 = sbr.rel (%p128) target = $region24
      $region23: #{bilin_conv_upsampling.1} parent=5 // pred_region
        // Predicated region
        $region25: #{bilin_conv_upsampling.1} parent=23 // pred_check
          %p131 = pneg %p32
        $region26: #{bilin_conv_upsampling.1} parent=23 // pred_check_branch
          %133 = sbr.rel (%p131) target = $region28
        $region27: #{bilin_conv_upsampling.1} parent=23 // pred_region
          %p134 = scmp.lt.s32.totalorder %s12, 1
          %s135 = scalar_select %p134, %s12, 1
          %s136 = smul.addr %s135, 8
          %s137 = smul.addr %s136, 8
          %s138 = scalar_lea.vmem %s0, %s137
        $region28: #{bilin_conv_upsampling.1} parent=23 // pred_fallthru
          _
      $region24: #{bilin_conv_upsampling.1} parent=5 // pred_fallthru
        _
      %p139 = scmp.le.s32.totalorder 1, %s12
      %p140 = scmp.lt.s32.totalorder %s12, 3
      %p141 = pnand %p139, %p140
      %p142 = pneg %p141
      // Predicated region
      $region29: #{bilin_conv_upsampling.1} parent=5 // pred_check
        _
      $region30: #{bilin_conv_upsampling.1} parent=5 // pred_check_branch
        %144 = sbr.rel (%p141) target = $region32
      $region31: #{bilin_conv_upsampling.1} parent=5 // pred_region
        %s145 = ssub.s32 %s12, 1
        %p146 = scmp.lt.s32.totalorder %s17, 1
        %s147 = scalar_select %p146, %s17, 1
        %s148 = smul.addr %s147, 8
        %s149 = smul.addr %s148, 8
        %s150 = scalar_lea.vmem %s0, %s149
        %p151 = pneg %p38
        %p152 = pneg %p35
        %p153 = pneg %p59
        %p154 = pneg %p56
        %p155 = pneg %p80
        %p156 = pneg %p77
        %p157 = pneg %p106
        %p158 = pneg %p103
        %s159 = sand.u32 %s93, 1
        %s160 = scalar_lea.sflag [#allocation3], %s159
        %s161 = sand.u32 %s93, 1
        %s162 = smul.addr %s161, 256
        %s163 = scalar_lea.vmem [#allocation2], %s162
        %p164 = scmp.lt.s32.totalorder %s17, 1
        %s165 = scalar_select %p164, %s17, 1
        %s166 = smul.addr %s165, 8
        %s167 = smul.addr %s166, 8
        %s168 = scalar_lea.vmem %s0, %s167
        %v169 = vld [vmem:[%s168] sm:$0xff]
        %v170 = vld [vmem:[%s168 + $0x8] sm:$0xff]
        %v171 = vld [vmem:[%s168 + $0x10] sm:$0xff]
        %v172 = vld [vmem:[%s168 + $0x18] sm:$0xff]
        %v173 = vld [vmem:[%s168 + $0x20] sm:$0xff]
        %v174 = vld [vmem:[%s168 + $0x28] sm:$0xff]
        %v175 = vld [vmem:[%s168 + $0x30] sm:$0xff]
        %v176 = vld [vmem:[%s168 + $0x38] sm:$0xff]
        %v177 = vld [vmem:[%s1] sm:$0xff]
        %v178 = vld [vmem:[%s1 + $0x8] sm:$0xff]
        %v179 = vld [vmem:[%s1 + $0x10] sm:$0xff]
        %v180 = vld [vmem:[%s1 + $0x18] sm:$0xff]
        %v181 = vld [vmem:[%s1 + $0x20] sm:$0xff]
        %v182 = vld [vmem:[%s1 + $0x28] sm:$0xff]
        %v183 = vld [vmem:[%s1 + $0x30] sm:$0xff]
        %v184 = vld [vmem:[%s1 + $0x38] sm:$0xff]
        %v185 = vld [vmem:[%s1 + $0x40] sm:$0xff]
        %v186 = vld [vmem:[%s1 + $0x48] sm:$0xff]
        %v187 = vld [vmem:[%s1 + $0x50] sm:$0xff]
        %v188 = vld [vmem:[%s1 + $0x58] sm:$0xff]
        %v189 = vld [vmem:[%s1 + $0x60] sm:$0xff]
        %v190 = vld [vmem:[%s1 + $0x68] sm:$0xff]
        %v191 = vld [vmem:[%s1 + $0x70] sm:$0xff]
        %v192 = vld [vmem:[%s1 + $0x78] sm:$0xff]
        %v193 = vld [vmem:[%s1 + $0x80] sm:$0xff]
        %v194 = vld [vmem:[%s1 + $0x88] sm:$0xff]
        %v195 = vld [vmem:[%s1 + $0x90] sm:$0xff]
        %v196 = vld [vmem:[%s1 + $0x98] sm:$0xff]
        %v197 = vld [vmem:[%s1 + $0xa0] sm:$0xff]
        %v198 = vld [vmem:[%s1 + $0xa8] sm:$0xff]
        %v199 = vld [vmem:[%s1 + $0xb0] sm:$0xff]
        %v200 = vld [vmem:[%s1 + $0xb8] sm:$0xff]
        %v201 = vld [vmem:[%s1 + $0xc0] sm:$0xff]
        %v202 = vld [vmem:[%s1 + $0xc8] sm:$0xff]
        %v203 = vld [vmem:[%s1 + $0xd0] sm:$0xff]
        %v204 = vld [vmem:[%s1 + $0xd8] sm:$0xff]
        %v205 = vld [vmem:[%s1 + $0xe0] sm:$0xff]
        %v206 = vld [vmem:[%s1 + $0xe8] sm:$0xff]
        %v207 = vld [vmem:[%s1 + $0xf0] sm:$0xff]
        %v208 = vld [vmem:[%s1 + $0xf8] sm:$0xff]
        %v209 = vld [vmem:[%s1 + $0x100] sm:$0xff]
        %v210 = vld [vmem:[%s1 + $0x108] sm:$0xff]
        %v211 = vld [vmem:[%s1 + $0x110] sm:$0xff]
        %v212 = vld [vmem:[%s1 + $0x118] sm:$0xff]
        %v213 = vld [vmem:[%s1 + $0x120] sm:$0xff]
        %v214 = vld [vmem:[%s1 + $0x128] sm:$0xff]
        %v215 = vld [vmem:[%s1 + $0x130] sm:$0xff]
        %v216 = vld [vmem:[%s1 + $0x138] sm:$0xff]
        %v217 = vld [vmem:[%s1 + $0x140] sm:$0xff]
        %v218 = vld [vmem:[%s1 + $0x148] sm:$0xff]
        %v219 = vld [vmem:[%s1 + $0x150] sm:$0xff]
        %v220 = vld [vmem:[%s1 + $0x158] sm:$0xff]
        %v221 = vld [vmem:[%s1 + $0x160] sm:$0xff]
        %v222 = vld [vmem:[%s1 + $0x168] sm:$0xff]
        %v223 = vld [vmem:[%s1 + $0x170] sm:$0xff]
        %v224 = vld [vmem:[%s1 + $0x178] sm:$0xff]
        %v225 = vld [vmem:[%s1 + $0x180] sm:$0xff]
        %v226 = vld [vmem:[%s1 + $0x188] sm:$0xff]
        %v227 = vld [vmem:[%s1 + $0x190] sm:$0xff]
        %v228 = vld [vmem:[%s1 + $0x198] sm:$0xff]
        %v229 = vld [vmem:[%s1 + $0x1a0] sm:$0xff]
        %v230 = vld [vmem:[%s1 + $0x1a8] sm:$0xff]
        %v231 = vld [vmem:[%s1 + $0x1b0] sm:$0xff]
        %v232 = vld [vmem:[%s1 + $0x1b8] sm:$0xff]
        %v233 = vld [vmem:[%s1 + $0x1c0] sm:$0xff]
        %v234 = vld [vmem:[%s1 + $0x1c8] sm:$0xff]
        %v235 = vld [vmem:[%s1 + $0x1d0] sm:$0xff]
        %v236 = vld [vmem:[%s1 + $0x1d8] sm:$0xff]
        %v237 = vld [vmem:[%s1 + $0x1e0] sm:$0xff]
        %v238 = vld [vmem:[%s1 + $0x1e8] sm:$0xff]
        %v239 = vld [vmem:[%s1 + $0x1f0] sm:$0xff]
        %v240 = vld [vmem:[%s1 + $0x1f8] sm:$0xff]
        %v241 = vld [vmem:[%s1 + $0x200] sm:$0xff]
        %v242 = vld [vmem:[%s1 + $0x208] sm:$0xff]
        %v243 = vld [vmem:[%s1 + $0x210] sm:$0xff]
        %v244 = vld [vmem:[%s1 + $0x218] sm:$0xff]
        %v245 = vld [vmem:[%s1 + $0x220] sm:$0xff]
        %v246 = vld [vmem:[%s1 + $0x228] sm:$0xff]
        %v247 = vld [vmem:[%s1 + $0x230] sm:$0xff]
        %v248 = vld [vmem:[%s1 + $0x238] sm:$0xff]
        %v249 = vld [vmem:[%s1 + $0x240] sm:$0xff]
        %v250 = vld [vmem:[%s1 + $0x248] sm:$0xff]
        %v251 = vld [vmem:[%s1 + $0x250] sm:$0xff]
        %v252 = vld [vmem:[%s1 + $0x258] sm:$0xff]
        %v253 = vld [vmem:[%s1 + $0x260] sm:$0xff]
        %v254 = vld [vmem:[%s1 + $0x268] sm:$0xff]
        %v255 = vld [vmem:[%s1 + $0x270] sm:$0xff]
        %v256 = vld [vmem:[%s1 + $0x278] sm:$0xff]
        %v257 = vld [vmem:[%s1 + $0x280] sm:$0xff]
        %v258 = vld [vmem:[%s1 + $0x288] sm:$0xff]
        %v259 = vld [vmem:[%s1 + $0x290] sm:$0xff]
        %v260 = vld [vmem:[%s1 + $0x298] sm:$0xff]
        %v261 = vld [vmem:[%s1 + $0x2a0] sm:$0xff]
        %v262 = vld [vmem:[%s1 + $0x2a8] sm:$0xff]
        %v263 = vld [vmem:[%s1 + $0x2b0] sm:$0xff]
        %v264 = vld [vmem:[%s1 + $0x2b8] sm:$0xff]
        %v265 = vld [vmem:[%s1 + $0x2c0] sm:$0xff]
        %v266 = vld [vmem:[%s1 + $0x2c8] sm:$0xff]
        %v267 = vld [vmem:[%s1 + $0x2d0] sm:$0xff]
        %v268 = vld [vmem:[%s1 + $0x2d8] sm:$0xff]
        %v269 = vld [vmem:[%s1 + $0x2e0] sm:$0xff]
        %v270 = vld [vmem:[%s1 + $0x2e8] sm:$0xff]
        %v271 = vld [vmem:[%s1 + $0x2f0] sm:$0xff]
        %v272 = vld [vmem:[%s1 + $0x2f8] sm:$0xff]
        %vm273 = vcmask 523264
        %v275 = vsel %vm273, %v177, 0
        %v278 = vsel %vm273, %v178, 0
        %v281 = vsel %vm273, %v179, 0
        %v284 = vsel %vm273, %v180, 0
        %v287 = vsel %vm273, %v181, 0
        %v290 = vsel %vm273, %v182, 0
        %v293 = vsel %vm273, %v183, 0
        %v296 = vsel %vm273, %v184, 0
        %v299 = vsel %vm273, %v185, 0
        %v302 = vsel %vm273, %v186, 0
        %v305 = vsel %vm273, %v187, 0
        %v308 = vsel %vm273, %v188, 0
        %v311 = vsel %vm273, %v189, 0
        %v314 = vsel %vm273, %v190, 0
        %v317 = vsel %vm273, %v191, 0
        %v320 = vsel %vm273, %v192, 0
        %v323 = vsel %vm273, %v193, 0
        %v326 = vsel %vm273, %v194, 0
        %v329 = vsel %vm273, %v195, 0
        %v332 = vsel %vm273, %v196, 0
        %v335 = vsel %vm273, %v197, 0
        %v338 = vsel %vm273, %v198, 0
        %v341 = vsel %vm273, %v199, 0
        %v344 = vsel %vm273, %v200, 0
        %v347 = vsel %vm273, %v201, 0
        %v350 = vsel %vm273, %v202, 0
        %v353 = vsel %vm273, %v203, 0
        %v356 = vsel %vm273, %v204, 0
        %v359 = vsel %vm273, %v205, 0
        %v362 = vsel %vm273, %v206, 0
        %v365 = vsel %vm273, %v207, 0
        %v368 = vsel %vm273, %v208, 0
        %v371 = vsel %vm273, %v209, 0
        %v374 = vsel %vm273, %v210, 0
        %v377 = vsel %vm273, %v211, 0
        %v380 = vsel %vm273, %v212, 0
        %v383 = vsel %vm273, %v213, 0
        %v386 = vsel %vm273, %v214, 0
        %v389 = vsel %vm273, %v215, 0
        %v392 = vsel %vm273, %v216, 0
        %v395 = vsel %vm273, %v217, 0
        %v398 = vsel %vm273, %v218, 0
        %v401 = vsel %vm273, %v219, 0
        %v404 = vsel %vm273, %v220, 0
        %v407 = vsel %vm273, %v221, 0
        %v410 = vsel %vm273, %v222, 0
        %v413 = vsel %vm273, %v223, 0
        %v416 = vsel %vm273, %v224, 0
        %v419 = vsel %vm273, %v225, 0
        %v422 = vsel %vm273, %v226, 0
        %v425 = vsel %vm273, %v227, 0
        %v428 = vsel %vm273, %v228, 0
        %v431 = vsel %vm273, %v229, 0
        %v434 = vsel %vm273, %v230, 0
        %v437 = vsel %vm273, %v231, 0
        %v440 = vsel %vm273, %v232, 0
        %v443 = vsel %vm273, %v233, 0
        %v446 = vsel %vm273, %v234, 0
        %v449 = vsel %vm273, %v235, 0
        %v452 = vsel %vm273, %v236, 0
        %v455 = vsel %vm273, %v237, 0
        %v458 = vsel %vm273, %v238, 0
        %v461 = vsel %vm273, %v239, 0
        %v464 = vsel %vm273, %v240, 0
        %v467 = vsel %vm273, %v241, 0
        %v470 = vsel %vm273, %v242, 0
        %v473 = vsel %vm273, %v243, 0
        %v476 = vsel %vm273, %v244, 0
        %v479 = vsel %vm273, %v245, 0
        %v482 = vsel %vm273, %v246, 0
        %v485 = vsel %vm273, %v247, 0
        %v488 = vsel %vm273, %v248, 0
        %v491 = vsel %vm273, %v249, 0
        %v494 = vsel %vm273, %v250, 0
        %v497 = vsel %vm273, %v251, 0
        %v500 = vsel %vm273, %v252, 0
        %v503 = vsel %vm273, %v253, 0
        %v506 = vsel %vm273, %v254, 0
        %v509 = vsel %vm273, %v255, 0
        %v512 = vsel %vm273, %v256, 0
        %v515 = vsel %vm273, %v257, 0
        %v518 = vsel %vm273, %v258, 0
        %v521 = vsel %vm273, %v259, 0
        %v524 = vsel %vm273, %v260, 0
        %v527 = vsel %vm273, %v261, 0
        %v530 = vsel %vm273, %v262, 0
        %v533 = vsel %vm273, %v263, 0
        %v536 = vsel %vm273, %v264, 0
        %v539 = vsel %vm273, %v265, 0
        %v542 = vsel %vm273, %v266, 0
        %v545 = vsel %vm273, %v267, 0
        %v548 = vsel %vm273, %v268, 0
        %v551 = vsel %vm273, %v269, 0
        %v554 = vsel %vm273, %v270, 0
        %v557 = vsel %vm273, %v271, 0
        %v560 = vsel %vm273, %v272, 0
        %562 = vmatprep.subr.mxu0 0.0
        %563 = vmatpush1.msra.mxu0 0.0
        %564 = vmatprep.subr.mxu0 0.0
        %565 = vmatpush1.msra.mxu0 0.0
        %566 = vmatprep.subr.mxu0 0.0
        %567 = vmatpush1.msra.mxu0 0.0
        %568 = vmatprep.subr.mxu0 0.0
        %569 = vmatpush1.msra.mxu0 0.0
        %570 = vmatprep.subr.mxu0 0.0
        %571 = vmatpush1.msra.mxu0 0.0
        %572 = vmatprep.subr.mxu0 0.0
        %573 = vmatpush1.msra.mxu0 0.0
        %574 = vmatprep.subr.mxu0 0.0
        %575 = vmatpush1.msra.mxu0 0.0
        %576 = vmatprep.subr.mxu0 0.0
        %577 = vmatpush1.msra.mxu0 0.0
        %578 = vmatprep.subr.mxu0 0.0
        %579 = vmatpush1.msra.mxu0 %v176
        %580 = vmatprep.subr.mxu0 0.0
        %581 = vmatpush1.msra.mxu0 %v175
        %582 = vmatprep.subr.mxu0 0.0
        %583 = vmatpush1.msra.mxu0 %v174
        %584 = vmatprep.subr.mxu0 0.0
        %585 = vmatpush1.msra.mxu0 %v173
        %586 = vmatprep.subr.mxu0 0.0
        %587 = vmatpush1.msra.mxu0 %v172
        %588 = vmatprep.subr.mxu0 0.0
        %589 = vmatpush1.msra.mxu0 %v171
        %590 = vmatprep.subr.mxu0 0.0
        %591 = vmatpush1.msra.mxu0 %v170
        %592 = vmatprep.subr.mxu0 0.0
        %593 = vmatpush1.msra.mxu0 %v169
        %594 = vmatprep.subr.mxu0 0.0
        %595 = vmatpush2.msra.mxu0 0.0
        %596 = vmatprep.subr.mxu0 0.0
        %597 = vmatpush2.msra.mxu0 0.0
        %598 = vmatprep.subr.mxu0 0.0
        %599 = vmatpush2.msra.mxu0 0.0
        %600 = vmatprep.subr.mxu0 0.0
        %601 = vmatpush2.msra.mxu0 0.0
        %602 = vmatprep.subr.mxu0 0.0
        %603 = vmatpush2.msra.mxu0 0.0
        %604 = vmatprep.subr.mxu0 0.0
        %605 = vmatpush2.msra.mxu0 0.0
        %606 = vmatprep.subr.mxu0 0.0
        %607 = vmatpush2.msra.mxu0 0.0
        %608 = vmatprep.subr.mxu0 0.0
        %609 = vmatpush2.msra.mxu0 0.0
        %610 = vmatprep.subr.mxu0 0.0
        %611 = vmatpush2.msra.mxu0 0.0
        %612 = vmatprep.subr.mxu0 0.0
        %613 = vmatpush2.msra.mxu0 0.0
        %614 = vmatprep.subr.mxu0 0.0
        %615 = vmatpush2.msra.mxu0 0.0
        %616 = vmatprep.subr.mxu0 0.0
        %617 = vmatpush2.msra.mxu0 0.0
        %618 = vmatprep.subr.mxu0 0.0
        %619 = vmatpush2.msra.mxu0 0.0
        %620 = vmatprep.subr.mxu0 0.0
        %621 = vmatpush2.msra.mxu0 0.0
        %622 = vmatprep.subr.mxu0 0.0
        %623 = vmatpush2.msra.mxu0 0.0
        %624 = vmatprep.subr.mxu0 0.0
        %625 = vmatpush2.msra.mxu0 0.0
        %626 = vmatprep.mubr.f32.mxu0 0.0
        %627 = vmatmul.mubr.f32.gmra.mxu0 %v275
        %v628 = vpop.f32.mrf.mxu0
        %v629 = vadd.f32 0.0, %v628
        %v630 = vpop.f32.mrf.mxu0
        %631 = vmatprep.mubr.f32.mxu0 0.0
        %632 = vmatmul.mubr.f32.gmra.mxu0 %v278
        %v633 = vpop.f32.mrf.mxu0
        %v634 = vadd.f32 0.0, %v633
        %v635 = vpop.f32.mrf.mxu0
        %636 = vmatprep.mubr.f32.mxu0 0.0
        %637 = vmatmul.mubr.f32.gmra.mxu0 %v281
        %v638 = vpop.f32.mrf.mxu0
        %v639 = vadd.f32 0.0, %v638
        %v640 = vpop.f32.mrf.mxu0
        %641 = vmatprep.mubr.f32.mxu0 0.0
        %642 = vmatmul.mubr.f32.gmra.mxu0 %v284
        %v643 = vpop.f32.mrf.mxu0
        %v644 = vadd.f32 0.0, %v643
        %v645 = vpop.f32.mrf.mxu0
        %646 = vmatprep.mubr.f32.mxu0 0.0
        %647 = vmatmul.mubr.f32.gmra.mxu0 %v287
        %v648 = vpop.f32.mrf.mxu0
        %v649 = vadd.f32 0.0, %v648
        %v650 = vpop.f32.mrf.mxu0
        %651 = vmatprep.mubr.f32.mxu0 0.0
        %652 = vmatmul.mubr.f32.gmra.mxu0 %v290
        %v653 = vpop.f32.mrf.mxu0
        %v654 = vadd.f32 0.0, %v653
        %v655 = vpop.f32.mrf.mxu0
        %656 = vmatprep.mubr.f32.mxu0 0.0
        %657 = vmatmul.mubr.f32.gmra.mxu0 %v293
        %v658 = vpop.f32.mrf.mxu0
        %v659 = vadd.f32 0.0, %v658
        %v660 = vpop.f32.mrf.mxu0
        %661 = vmatprep.mubr.f32.mxu0 0.0
        %662 = vmatmul.mubr.f32.gmra.mxu0 %v296
        %v663 = vpop.f32.mrf.mxu0
        %v664 = vadd.f32 0.0, %v663
        %v665 = vpop.f32.mrf.mxu0
        %666 = vmatprep.mubr.f32.mxu0 0.0
        %667 = vmatmul.mubr.f32.gmra.mxu0 %v299
        %v668 = vpop.f32.mrf.mxu0
        %v669 = vadd.f32 0.0, %v668
        %v670 = vpop.f32.mrf.mxu0
        %671 = vmatprep.mubr.f32.mxu0 0.0
        %672 = vmatmul.mubr.f32.gmra.mxu0 %v302
        %v673 = vpop.f32.mrf.mxu0
        %v674 = vadd.f32 0.0, %v673
        %v675 = vpop.f32.mrf.mxu0
        %676 = vmatprep.mubr.f32.mxu0 0.0
        %677 = vmatmul.mubr.f32.gmra.mxu0 %v305
        %v678 = vpop.f32.mrf.mxu0
        %v679 = vadd.f32 0.0, %v678
        %v680 = vpop.f32.mrf.mxu0
        %681 = vmatprep.mubr.f32.mxu0 0.0
        %682 = vmatmul.mubr.f32.gmra.mxu0 %v308
        %v683 = vpop.f32.mrf.mxu0
        %v684 = vadd.f32 0.0, %v683
        %v685 = vpop.f32.mrf.mxu0
        %686 = vmatprep.mubr.f32.mxu0 0.0
        %687 = vmatmul.mubr.f32.gmra.mxu0 %v311
        %v688 = vpop.f32.mrf.mxu0
        %v689 = vadd.f32 0.0, %v688
        %v690 = vpop.f32.mrf.mxu0
        %691 = vmatprep.mubr.f32.mxu0 0.0
        %692 = vmatmul.mubr.f32.gmra.mxu0 %v314
        %v693 = vpop.f32.mrf.mxu0
        %v694 = vadd.f32 0.0, %v693
        %v695 = vpop.f32.mrf.mxu0
        %696 = vmatprep.mubr.f32.mxu0 0.0
        %697 = vmatmul.mubr.f32.gmra.mxu0 %v317
        %v698 = vpop.f32.mrf.mxu0
        %v699 = vadd.f32 0.0, %v698
        %v700 = vpop.f32.mrf.mxu0
        %701 = vmatprep.mubr.f32.mxu0 0.0
        %702 = vmatmul.mubr.f32.gmra.mxu0 %v320
        %v703 = vpop.f32.mrf.mxu0
        %v704 = vadd.f32 0.0, %v703
        %v705 = vpop.f32.mrf.mxu0
        %706 = vmatprep.mubr.f32.mxu0 0.0
        %707 = vmatmul.mubr.f32.gmra.mxu0 %v323
        %v708 = vpop.f32.mrf.mxu0
        %v709 = vadd.f32 0.0, %v708
        %v710 = vpop.f32.mrf.mxu0
        %711 = vmatprep.mubr.f32.mxu0 0.0
        %712 = vmatmul.mubr.f32.gmra.mxu0 %v326
        %v713 = vpop.f32.mrf.mxu0
        %v714 = vadd.f32 0.0, %v713
        %v715 = vpop.f32.mrf.mxu0
        %716 = vmatprep.mubr.f32.mxu0 0.0
        %717 = vmatmul.mubr.f32.gmra.mxu0 %v329
        %v718 = vpop.f32.mrf.mxu0
        %v719 = vadd.f32 0.0, %v718
        %v720 = vpop.f32.mrf.mxu0
        %721 = vmatprep.mubr.f32.mxu0 0.0
        %722 = vmatmul.mubr.f32.gmra.mxu0 %v332
        %v723 = vpop.f32.mrf.mxu0
        %v724 = vadd.f32 0.0, %v723
        %v725 = vpop.f32.mrf.mxu0
        %726 = vmatprep.mubr.f32.mxu0 0.0
        %727 = vmatmul.mubr.f32.gmra.mxu0 %v335
        %v728 = vpop.f32.mrf.mxu0
        %v729 = vadd.f32 0.0, %v728
        %v730 = vpop.f32.mrf.mxu0
        %731 = vmatprep.mubr.f32.mxu0 0.0
        %732 = vmatmul.mubr.f32.gmra.mxu0 %v338
        %v733 = vpop.f32.mrf.mxu0
        %v734 = vadd.f32 0.0, %v733
        %v735 = vpop.f32.mrf.mxu0
        %736 = vmatprep.mubr.f32.mxu0 0.0
        %737 = vmatmul.mubr.f32.gmra.mxu0 %v341
        %v738 = vpop.f32.mrf.mxu0
        %v739 = vadd.f32 0.0, %v738
        %v740 = vpop.f32.mrf.mxu0
        %741 = vmatprep.mubr.f32.mxu0 0.0
        %742 = vmatmul.mubr.f32.gmra.mxu0 %v344
        %v743 = vpop.f32.mrf.mxu0
        %v744 = vadd.f32 0.0, %v743
        %v745 = vpop.f32.mrf.mxu0
        %746 = vmatprep.mubr.f32.mxu0 0.0
        %747 = vmatmul.mubr.f32.gmra.mxu0 %v347
        %v748 = vpop.f32.mrf.mxu0
        %v749 = vadd.f32 0.0, %v748
        %v750 = vpop.f32.mrf.mxu0
        %751 = vmatprep.mubr.f32.mxu0 0.0
        %752 = vmatmul.mubr.f32.gmra.mxu0 %v350
        %v753 = vpop.f32.mrf.mxu0
        %v754 = vadd.f32 0.0, %v753
        %v755 = vpop.f32.mrf.mxu0
        %756 = vmatprep.mubr.f32.mxu0 0.0
        %757 = vmatmul.mubr.f32.gmra.mxu0 %v353
        %v758 = vpop.f32.mrf.mxu0
        %v759 = vadd.f32 0.0, %v758
        %v760 = vpop.f32.mrf.mxu0
        %761 = vmatprep.mubr.f32.mxu0 0.0
        %762 = vmatmul.mubr.f32.gmra.mxu0 %v356
        %v763 = vpop.f32.mrf.mxu0
        %v764 = vadd.f32 0.0, %v763
        %v765 = vpop.f32.mrf.mxu0
        %766 = vmatprep.mubr.f32.mxu0 0.0
        %767 = vmatmul.mubr.f32.gmra.mxu0 %v359
        %v768 = vpop.f32.mrf.mxu0
        %v769 = vadd.f32 0.0, %v768
        %v770 = vpop.f32.mrf.mxu0
        %771 = vmatprep.mubr.f32.mxu0 0.0
        %772 = vmatmul.mubr.f32.gmra.mxu0 %v362
        %v773 = vpop.f32.mrf.mxu0
        %v774 = vadd.f32 0.0, %v773
        %v775 = vpop.f32.mrf.mxu0
        %776 = vmatprep.mubr.f32.mxu0 0.0
        %777 = vmatmul.mubr.f32.gmra.mxu0 %v365
        %v778 = vpop.f32.mrf.mxu0
        %v779 = vadd.f32 0.0, %v778
        %v780 = vpop.f32.mrf.mxu0
        %781 = vmatprep.mubr.f32.mxu0 0.0
        %782 = vmatmul.mubr.f32.gmra.mxu0 %v368
        %v783 = vpop.f32.mrf.mxu0
        %v784 = vadd.f32 0.0, %v783
        %v785 = vpop.f32.mrf.mxu0
        %786 = vmatprep.mubr.f32.mxu0 0.0
        %787 = vmatmul.mubr.f32.gmra.mxu0 %v371
        %v788 = vpop.f32.mrf.mxu0
        %v789 = vadd.f32 0.0, %v788
        %v790 = vpop.f32.mrf.mxu0
        %791 = vmatprep.mubr.f32.mxu0 0.0
        %792 = vmatmul.mubr.f32.gmra.mxu0 %v374
        %v793 = vpop.f32.mrf.mxu0
        %v794 = vadd.f32 0.0, %v793
        %v795 = vpop.f32.mrf.mxu0
        %796 = vmatprep.mubr.f32.mxu0 0.0
        %797 = vmatmul.mubr.f32.gmra.mxu0 %v377
        %v798 = vpop.f32.mrf.mxu0
        %v799 = vadd.f32 0.0, %v798
        %v800 = vpop.f32.mrf.mxu0
        %801 = vmatprep.mubr.f32.mxu0 0.0
        %802 = vmatmul.mubr.f32.gmra.mxu0 %v380
        %v803 = vpop.f32.mrf.mxu0
        %v804 = vadd.f32 0.0, %v803
        %v805 = vpop.f32.mrf.mxu0
        %806 = vmatprep.mubr.f32.mxu0 0.0
        %807 = vmatmul.mubr.f32.gmra.mxu0 %v383
        %v808 = vpop.f32.mrf.mxu0
        %v809 = vadd.f32 0.0, %v808
        %v810 = vpop.f32.mrf.mxu0
        %811 = vmatprep.mubr.f32.mxu0 0.0
        %812 = vmatmul.mubr.f32.gmra.mxu0 %v386
        %v813 = vpop.f32.mrf.mxu0
        %v814 = vadd.f32 0.0, %v813
        %v815 = vpop.f32.mrf.mxu0
        %816 = vmatprep.mubr.f32.mxu0 0.0
        %817 = vmatmul.mubr.f32.gmra.mxu0 %v389
        %v818 = vpop.f32.mrf.mxu0
        %v819 = vadd.f32 0.0, %v818
        %v820 = vpop.f32.mrf.mxu0
        %821 = vmatprep.mubr.f32.mxu0 0.0
        %822 = vmatmul.mubr.f32.gmra.mxu0 %v392
        %v823 = vpop.f32.mrf.mxu0
        %v824 = vadd.f32 0.0, %v823
        %v825 = vpop.f32.mrf.mxu0
        %826 = vmatprep.mubr.f32.mxu0 0.0
        %827 = vmatmul.mubr.f32.gmra.mxu0 %v395
        %v828 = vpop.f32.mrf.mxu0
        %v829 = vadd.f32 0.0, %v828
        %v830 = vpop.f32.mrf.mxu0
        %831 = vmatprep.mubr.f32.mxu0 0.0
        %832 = vmatmul.mubr.f32.gmra.mxu0 %v398
        %v833 = vpop.f32.mrf.mxu0
        %v834 = vadd.f32 0.0, %v833
        %v835 = vpop.f32.mrf.mxu0
        %836 = vmatprep.mubr.f32.mxu0 0.0
        %837 = vmatmul.mubr.f32.gmra.mxu0 %v401
        %v838 = vpop.f32.mrf.mxu0
        %v839 = vadd.f32 0.0, %v838
        %v840 = vpop.f32.mrf.mxu0
        %841 = vmatprep.mubr.f32.mxu0 0.0
        %842 = vmatmul.mubr.f32.gmra.mxu0 %v404
        %v843 = vpop.f32.mrf.mxu0
        %v844 = vadd.f32 0.0, %v843
        %v845 = vpop.f32.mrf.mxu0
        %846 = vmatprep.mubr.f32.mxu0 0.0
        %847 = vmatmul.mubr.f32.gmra.mxu0 %v407
        %v848 = vpop.f32.mrf.mxu0
        %v849 = vadd.f32 0.0, %v848
        %v850 = vpop.f32.mrf.mxu0
        %851 = vmatprep.mubr.f32.mxu0 0.0
        %852 = vmatmul.mubr.f32.gmra.mxu0 %v410
        %v853 = vpop.f32.mrf.mxu0
        %v854 = vadd.f32 0.0, %v853
        %v855 = vpop.f32.mrf.mxu0
        %856 = vmatprep.mubr.f32.mxu0 0.0
        %857 = vmatmul.mubr.f32.gmra.mxu0 %v413
        %v858 = vpop.f32.mrf.mxu0
        %v859 = vadd.f32 0.0, %v858
        %v860 = vpop.f32.mrf.mxu0
        %861 = vmatprep.mubr.f32.mxu0 0.0
        %862 = vmatmul.mubr.f32.gmra.mxu0 %v416
        %v863 = vpop.f32.mrf.mxu0
        %v864 = vadd.f32 0.0, %v863
        %v865 = vpop.f32.mrf.mxu0
        %866 = vmatprep.mubr.f32.mxu0 0.0
        %867 = vmatmul.mubr.f32.gmra.mxu0 %v419
        %v868 = vpop.f32.mrf.mxu0
        %v869 = vadd.f32 0.0, %v868
        %v870 = vpop.f32.mrf.mxu0
        %871 = vmatprep.mubr.f32.mxu0 0.0
        %872 = vmatmul.mubr.f32.gmra.mxu0 %v422
        %v873 = vpop.f32.mrf.mxu0
        %v874 = vadd.f32 0.0, %v873
        %v875 = vpop.f32.mrf.mxu0
        %876 = vmatprep.mubr.f32.mxu0 0.0
        %877 = vmatmul.mubr.f32.gmra.mxu0 %v425
        %v878 = vpop.f32.mrf.mxu0
        %v879 = vadd.f32 0.0, %v878
        %v880 = vpop.f32.mrf.mxu0
        %881 = vmatprep.mubr.f32.mxu0 0.0
        %882 = vmatmul.mubr.f32.gmra.mxu0 %v428
        %v883 = vpop.f32.mrf.mxu0
        %v884 = vadd.f32 0.0, %v883
        %v885 = vpop.f32.mrf.mxu0
        %886 = vmatprep.mubr.f32.mxu0 0.0
        %887 = vmatmul.mubr.f32.gmra.mxu0 %v431
        %v888 = vpop.f32.mrf.mxu0
        %v889 = vadd.f32 0.0, %v888
        %v890 = vpop.f32.mrf.mxu0
        %891 = vmatprep.mubr.f32.mxu0 0.0
        %892 = vmatmul.mubr.f32.gmra.mxu0 %v434
        %v893 = vpop.f32.mrf.mxu0
        %v894 = vadd.f32 0.0, %v893
        %v895 = vpop.f32.mrf.mxu0
        %896 = vmatprep.mubr.f32.mxu0 0.0
        %897 = vmatmul.mubr.f32.gmra.mxu0 %v437
        %v898 = vpop.f32.mrf.mxu0
        %v899 = vadd.f32 0.0, %v898
        %v900 = vpop.f32.mrf.mxu0
        %901 = vmatprep.mubr.f32.mxu0 0.0
        %902 = vmatmul.mubr.f32.gmra.mxu0 %v440
        %v903 = vpop.f32.mrf.mxu0
        %v904 = vadd.f32 0.0, %v903
        %v905 = vpop.f32.mrf.mxu0
        %906 = vmatprep.mubr.f32.mxu0 0.0
        %907 = vmatmul.mubr.f32.gmra.mxu0 %v443
        %v908 = vpop.f32.mrf.mxu0
        %v909 = vadd.f32 0.0, %v908
        %v910 = vpop.f32.mrf.mxu0
        %911 = vmatprep.mubr.f32.mxu0 0.0
        %912 = vmatmul.mubr.f32.gmra.mxu0 %v446
        %v913 = vpop.f32.mrf.mxu0
        %v914 = vadd.f32 0.0, %v913
        %v915 = vpop.f32.mrf.mxu0
        %916 = vmatprep.mubr.f32.mxu0 0.0
        %917 = vmatmul.mubr.f32.gmra.mxu0 %v449
        %v918 = vpop.f32.mrf.mxu0
        %v919 = vadd.f32 0.0, %v918
        %v920 = vpop.f32.mrf.mxu0
        %921 = vmatprep.mubr.f32.mxu0 0.0
        %922 = vmatmul.mubr.f32.gmra.mxu0 %v452
        %v923 = vpop.f32.mrf.mxu0
        %v924 = vadd.f32 0.0, %v923
        %v925 = vpop.f32.mrf.mxu0
        %926 = vmatprep.mubr.f32.mxu0 0.0
        %927 = vmatmul.mubr.f32.gmra.mxu0 %v455
        %v928 = vpop.f32.mrf.mxu0
        %v929 = vadd.f32 0.0, %v928
        %v930 = vpop.f32.mrf.mxu0
        %931 = vmatprep.mubr.f32.mxu0 0.0
        %932 = vmatmul.mubr.f32.gmra.mxu0 %v458
        %v933 = vpop.f32.mrf.mxu0
        %v934 = vadd.f32 0.0, %v933
        %v935 = vpop.f32.mrf.mxu0
        %936 = vmatprep.mubr.f32.mxu0 0.0
        %937 = vmatmul.mubr.f32.gmra.mxu0 %v461
        %v938 = vpop.f32.mrf.mxu0
        %v939 = vadd.f32 0.0, %v938
        %v940 = vpop.f32.mrf.mxu0
        %941 = vmatprep.mubr.f32.mxu0 0.0
        %942 = vmatmul.mubr.f32.gmra.mxu0 %v464
        %v943 = vpop.f32.mrf.mxu0
        %v944 = vadd.f32 0.0, %v943
        %v945 = vpop.f32.mrf.mxu0
        %946 = vmatprep.mubr.f32.mxu0 0.0
        %947 = vmatmul.mubr.f32.gmra.mxu0 %v467
        %v948 = vpop.f32.mrf.mxu0
        %v949 = vadd.f32 0.0, %v948
        %v950 = vpop.f32.mrf.mxu0
        %951 = vmatprep.mubr.f32.mxu0 0.0
        %952 = vmatmul.mubr.f32.gmra.mxu0 %v470
        %v953 = vpop.f32.mrf.mxu0
        %v954 = vadd.f32 0.0, %v953
        %v955 = vpop.f32.mrf.mxu0
        %956 = vmatprep.mubr.f32.mxu0 0.0
        %957 = vmatmul.mubr.f32.gmra.mxu0 %v473
        %v958 = vpop.f32.mrf.mxu0
        %v959 = vadd.f32 0.0, %v958
        %v960 = vpop.f32.mrf.mxu0
        %961 = vmatprep.mubr.f32.mxu0 0.0
        %962 = vmatmul.mubr.f32.gmra.mxu0 %v476
        %v963 = vpop.f32.mrf.mxu0
        %v964 = vadd.f32 0.0, %v963
        %v965 = vpop.f32.mrf.mxu0
        %966 = vmatprep.mubr.f32.mxu0 0.0
        %967 = vmatmul.mubr.f32.gmra.mxu0 %v479
        %v968 = vpop.f32.mrf.mxu0
        %v969 = vadd.f32 0.0, %v968
        %v970 = vpop.f32.mrf.mxu0
        %971 = vmatprep.mubr.f32.mxu0 0.0
        %972 = vmatmul.mubr.f32.gmra.mxu0 %v482
        %v973 = vpop.f32.mrf.mxu0
        %v974 = vadd.f32 0.0, %v973
        %v975 = vpop.f32.mrf.mxu0
        %976 = vmatprep.mubr.f32.mxu0 0.0
        %977 = vmatmul.mubr.f32.gmra.mxu0 %v485
        %v978 = vpop.f32.mrf.mxu0
        %v979 = vadd.f32 0.0, %v978
        %v980 = vpop.f32.mrf.mxu0
        %981 = vmatprep.mubr.f32.mxu0 0.0
        %982 = vmatmul.mubr.f32.gmra.mxu0 %v488
        %v983 = vpop.f32.mrf.mxu0
        %v984 = vadd.f32 0.0, %v983
        %v985 = vpop.f32.mrf.mxu0
        %986 = vmatprep.mubr.f32.mxu0 0.0
        %987 = vmatmul.mubr.f32.gmra.mxu0 %v491
        %v988 = vpop.f32.mrf.mxu0
        %v989 = vadd.f32 0.0, %v988
        %v990 = vpop.f32.mrf.mxu0
        %991 = vmatprep.mubr.f32.mxu0 0.0
        %992 = vmatmul.mubr.f32.gmra.mxu0 %v494
        %v993 = vpop.f32.mrf.mxu0
        %v994 = vadd.f32 0.0, %v993
        %v995 = vpop.f32.mrf.mxu0
        %996 = vmatprep.mubr.f32.mxu0 0.0
        %997 = vmatmul.mubr.f32.gmra.mxu0 %v497
        %v998 = vpop.f32.mrf.mxu0
        %v999 = vadd.f32 0.0, %v998
        %v1000 = vpop.f32.mrf.mxu0
        %1001 = vmatprep.mubr.f32.mxu0 0.0
        %1002 = vmatmul.mubr.f32.gmra.mxu0 %v500
        %v1003 = vpop.f32.mrf.mxu0
        %v1004 = vadd.f32 0.0, %v1003
        %v1005 = vpop.f32.mrf.mxu0
        %1006 = vmatprep.mubr.f32.mxu0 0.0
        %1007 = vmatmul.mubr.f32.gmra.mxu0 %v503
        %v1008 = vpop.f32.mrf.mxu0
        %v1009 = vadd.f32 0.0, %v1008
        %v1010 = vpop.f32.mrf.mxu0
        %1011 = vmatprep.mubr.f32.mxu0 0.0
        %1012 = vmatmul.mubr.f32.gmra.mxu0 %v506
        %v1013 = vpop.f32.mrf.mxu0
        %v1014 = vadd.f32 0.0, %v1013
        %v1015 = vpop.f32.mrf.mxu0
        %1016 = vmatprep.mubr.f32.mxu0 0.0
        %1017 = vmatmul.mubr.f32.gmra.mxu0 %v509
        %v1018 = vpop.f32.mrf.mxu0
        %v1019 = vadd.f32 0.0, %v1018
        %v1020 = vpop.f32.mrf.mxu0
        %1021 = vmatprep.mubr.f32.mxu0 0.0
        %1022 = vmatmul.mubr.f32.gmra.mxu0 %v512
        %v1023 = vpop.f32.mrf.mxu0
        %v1024 = vadd.f32 0.0, %v1023
        %v1025 = vpop.f32.mrf.mxu0
        %1026 = vmatprep.mubr.f32.mxu0 0.0
        %1027 = vmatmul.mubr.f32.gmra.mxu0 %v515
        %v1028 = vpop.f32.mrf.mxu0
        %v1029 = vadd.f32 0.0, %v1028
        %v1030 = vpop.f32.mrf.mxu0
        %1031 = vmatprep.mubr.f32.mxu0 0.0
        %1032 = vmatmul.mubr.f32.gmra.mxu0 %v518
        %v1033 = vpop.f32.mrf.mxu0
        %v1034 = vadd.f32 0.0, %v1033
        %v1035 = vpop.f32.mrf.mxu0
        %1036 = vmatprep.mubr.f32.mxu0 0.0
        %1037 = vmatmul.mubr.f32.gmra.mxu0 %v521
        %v1038 = vpop.f32.mrf.mxu0
        %v1039 = vadd.f32 0.0, %v1038
        %v1040 = vpop.f32.mrf.mxu0
        %1041 = vmatprep.mubr.f32.mxu0 0.0
        %1042 = vmatmul.mubr.f32.gmra.mxu0 %v524
        %v1043 = vpop.f32.mrf.mxu0
        %v1044 = vadd.f32 0.0, %v1043
        %v1045 = vpop.f32.mrf.mxu0
        %1046 = vmatprep.mubr.f32.mxu0 0.0
        %1047 = vmatmul.mubr.f32.gmra.mxu0 %v527
        %v1048 = vpop.f32.mrf.mxu0
        %v1049 = vadd.f32 0.0, %v1048
        %v1050 = vpop.f32.mrf.mxu0
        %1051 = vmatprep.mubr.f32.mxu0 0.0
        %1052 = vmatmul.mubr.f32.gmra.mxu0 %v530
        %v1053 = vpop.f32.mrf.mxu0
        %v1054 = vadd.f32 0.0, %v1053
        %v1055 = vpop.f32.mrf.mxu0
        %1056 = vmatprep.mubr.f32.mxu0 0.0
        %1057 = vmatmul.mubr.f32.gmra.mxu0 %v533
        %v1058 = vpop.f32.mrf.mxu0
        %v1059 = vadd.f32 0.0, %v1058
        %v1060 = vpop.f32.mrf.mxu0
        %1061 = vmatprep.mubr.f32.mxu0 0.0
        %1062 = vmatmul.mubr.f32.gmra.mxu0 %v536
        %v1063 = vpop.f32.mrf.mxu0
        %v1064 = vadd.f32 0.0, %v1063
        %v1065 = vpop.f32.mrf.mxu0
        %1066 = vmatprep.mubr.f32.mxu0 0.0
        %1067 = vmatmul.mubr.f32.gmra.mxu0 %v539
        %v1068 = vpop.f32.mrf.mxu0
        %v1069 = vadd.f32 0.0, %v1068
        %v1070 = vpop.f32.mrf.mxu0
        %1071 = vmatprep.mubr.f32.mxu0 0.0
        %1072 = vmatmul.mubr.f32.gmra.mxu0 %v542
        %v1073 = vpop.f32.mrf.mxu0
        %v1074 = vadd.f32 0.0, %v1073
        %v1075 = vpop.f32.mrf.mxu0
        %1076 = vmatprep.mubr.f32.mxu0 0.0
        %1077 = vmatmul.mubr.f32.gmra.mxu0 %v545
        %v1078 = vpop.f32.mrf.mxu0
        %v1079 = vadd.f32 0.0, %v1078
        %v1080 = vpop.f32.mrf.mxu0
        %1081 = vmatprep.mubr.f32.mxu0 0.0
        %1082 = vmatmul.mubr.f32.gmra.mxu0 %v548
        %v1083 = vpop.f32.mrf.mxu0
        %v1084 = vadd.f32 0.0, %v1083
        %v1085 = vpop.f32.mrf.mxu0
        %1086 = vmatprep.mubr.f32.mxu0 0.0
        %1087 = vmatmul.mubr.f32.gmra.mxu0 %v551
        %v1088 = vpop.f32.mrf.mxu0
        %v1089 = vadd.f32 0.0, %v1088
        %v1090 = vpop.f32.mrf.mxu0
        %1091 = vmatprep.mubr.f32.mxu0 0.0
        %1092 = vmatmul.mubr.f32.gmra.mxu0 %v554
        %v1093 = vpop.f32.mrf.mxu0
        %v1094 = vadd.f32 0.0, %v1093
        %v1095 = vpop.f32.mrf.mxu0
        %1096 = vmatprep.mubr.f32.mxu0 0.0
        %1097 = vmatmul.mubr.f32.gmra.mxu0 %v557
        %v1098 = vpop.f32.mrf.mxu0
        %v1099 = vadd.f32 0.0, %v1098
        %v1100 = vpop.f32.mrf.mxu0
        %1101 = vmatprep.mubr.f32.mxu0 0.0
        %1102 = vmatmul.mubr.f32.gmra.mxu0 %v560
        %v1103 = vpop.f32.mrf.mxu0
        %v1104 = vadd.f32 0.0, %v1103
        %v1105 = vpop.f32.mrf.mxu0
        %1106 = vdwg.mxu0
        %v1107 = vld [vmem:[%s2] sm:$0xff]
        %v1108 = vld [vmem:[%s2 + $0x8] sm:$0xff]
        %s1109 = scalar_lea.vmem %s2, 16
        %v1110 = vld [vmem:[%s1109] sm:$0xff]
        %v1111 = vld [vmem:[%s1109 + $0x8] sm:$0xff]
        %vm1112 = vcmask 130048
        %v1114 = vsel %vm1112, %v789, 0
        %v1117 = vsel %vm1112, %v794, 0
        %v1120 = vsel %vm1112, %v799, 0
        %v1123 = vsel %vm1112, %v804, 0
        %v1126 = vsel %vm1112, %v809, 0
        %v1129 = vsel %vm1112, %v814, 0
        %v1132 = vsel %vm1112, %v819, 0
        %v1135 = vsel %vm1112, %v824, 0
        %v1138 = vsel %vm1112, %v829, 0
        %v1141 = vsel %vm1112, %v834, 0
        %v1144 = vsel %vm1112, %v839, 0
        %v1147 = vsel %vm1112, %v844, 0
        %v1150 = vsel %vm1112, %v849, 0
        %v1153 = vsel %vm1112, %v854, 0
        %v1156 = vsel %vm1112, %v859, 0
        %v1159 = vsel %vm1112, %v864, 0
        %v1162 = vsel %vm1112, %v869, 0
        %v1165 = vsel %vm1112, %v874, 0
        %v1168 = vsel %vm1112, %v879, 0
        %v1171 = vsel %vm1112, %v884, 0
        %v1174 = vsel %vm1112, %v889, 0
        %v1177 = vsel %vm1112, %v894, 0
        %v1180 = vsel %vm1112, %v899, 0
        %v1183 = vsel %vm1112, %v904, 0
        %v1186 = vsel %vm1112, %v909, 0
        %v1189 = vsel %vm1112, %v914, 0
        %v1192 = vsel %vm1112, %v919, 0
        %v1195 = vsel %vm1112, %v924, 0
        %v1198 = vsel %vm1112, %v929, 0
        %v1201 = vsel %vm1112, %v934, 0
        %v1204 = vsel %vm1112, %v939, 0
        %v1207 = vsel %vm1112, %v944, 0
        %1209 = vmatprep.subr.mxu0 0.0
        %1210 = vmatpush1.msra.mxu0 0.0
        %1211 = vmatprep.subr.mxu0 0.0
        %1212 = vmatpush1.msra.mxu0 0.0
        %1213 = vmatprep.subr.mxu0 0.0
        %1214 = vmatpush1.msra.mxu0 0.0
        %1215 = vmatprep.subr.mxu0 0.0
        %1216 = vmatpush1.msra.mxu0 0.0
        %1217 = vmatprep.subr.mxu0 0.0
        %1218 = vmatpush1.msra.mxu0 0.0
        %1219 = vmatprep.subr.mxu0 0.0
        %1220 = vmatpush1.msra.mxu0 0.0
        %1221 = vmatprep.subr.mxu0 0.0
        %1222 = vmatpush1.msra.mxu0 0.0
        %1223 = vmatprep.subr.mxu0 0.0
        %1224 = vmatpush1.msra.mxu0 0.0
        %1225 = vmatprep.subr.mxu0 0.0
        %1226 = vmatpush1.msra.mxu0 0.0
        %1227 = vmatprep.subr.mxu0 0.0
        %1228 = vmatpush1.msra.mxu0 0.0
        %1229 = vmatprep.subr.mxu0 0.0
        %1230 = vmatpush1.msra.mxu0 0.0
        %1231 = vmatprep.subr.mxu0 0.0
        %1232 = vmatpush1.msra.mxu0 0.0
        %1233 = vmatprep.subr.mxu0 0.0
        %1234 = vmatpush1.msra.mxu0 0.0
        %1235 = vmatprep.subr.mxu0 0.0
        %1236 = vmatpush1.msra.mxu0 0.0
        %1237 = vmatprep.subr.mxu0 0.0
        %1238 = vmatpush1.msra.mxu0 %v1111
        %1239 = vmatprep.subr.mxu0 0.0
        %1240 = vmatpush1.msra.mxu0 %v1110
        %1241 = vmatprep.subr.mxu0 0.0
        %1242 = vmatpush2.msra.mxu0 0.0
        %1243 = vmatprep.subr.mxu0 0.0
        %1244 = vmatpush2.msra.mxu0 0.0
        %1245 = vmatprep.subr.mxu0 0.0
        %1246 = vmatpush2.msra.mxu0 0.0
        %1247 = vmatprep.subr.mxu0 0.0
        %1248 = vmatpush2.msra.mxu0 0.0
        %1249 = vmatprep.subr.mxu0 0.0
        %1250 = vmatpush2.msra.mxu0 0.0
        %1251 = vmatprep.subr.mxu0 0.0
        %1252 = vmatpush2.msra.mxu0 0.0
        %1253 = vmatprep.subr.mxu0 0.0
        %1254 = vmatpush2.msra.mxu0 0.0
        %1255 = vmatprep.subr.mxu0 0.0
        %1256 = vmatpush2.msra.mxu0 0.0
        %1257 = vmatprep.subr.mxu0 0.0
        %1258 = vmatpush2.msra.mxu0 0.0
        %1259 = vmatprep.subr.mxu0 0.0
        %1260 = vmatpush2.msra.mxu0 0.0
        %1261 = vmatprep.subr.mxu0 0.0
        %1262 = vmatpush2.msra.mxu0 0.0
        %1263 = vmatprep.subr.mxu0 0.0
        %1264 = vmatpush2.msra.mxu0 0.0
        %1265 = vmatprep.subr.mxu0 0.0
        %1266 = vmatpush2.msra.mxu0 0.0
        %1267 = vmatprep.subr.mxu0 0.0
        %1268 = vmatpush2.msra.mxu0 0.0
        %1269 = vmatprep.subr.mxu0 0.0
        %1270 = vmatpush2.msra.mxu0 0.0
        %1271 = vmatprep.subr.mxu0 0.0
        %1272 = vmatpush2.msra.mxu0 0.0
        %1273 = vmatprep.mubr.f32.mxu0 0.0
        %1274 = vmatmul.mubr.f32.gmra.mxu0 %v1114
        %v1275 = vpop.f32.mrf.mxu0
        %v1276 = vadd.f32 0.0, %v1275
        %v1277 = vpop.f32.mrf.mxu0
        %1278 = vmatprep.mubr.f32.mxu0 0.0
        %1279 = vmatmul.mubr.f32.gmra.mxu0 %v1117
        %v1280 = vpop.f32.mrf.mxu0
        %v1281 = vadd.f32 0.0, %v1280
        %v1282 = vpop.f32.mrf.mxu0
        %1283 = vmatprep.mubr.f32.mxu0 0.0
        %1284 = vmatmul.mubr.f32.gmra.mxu0 %v1120
        %v1285 = vpop.f32.mrf.mxu0
        %v1286 = vadd.f32 0.0, %v1285
        %v1287 = vpop.f32.mrf.mxu0
        %1288 = vmatprep.mubr.f32.mxu0 0.0
        %1289 = vmatmul.mubr.f32.gmra.mxu0 %v1123
        %v1290 = vpop.f32.mrf.mxu0
        %v1291 = vadd.f32 0.0, %v1290
        %v1292 = vpop.f32.mrf.mxu0
        %1293 = vmatprep.mubr.f32.mxu0 0.0
        %1294 = vmatmul.mubr.f32.gmra.mxu0 %v1126
        %v1295 = vpop.f32.mrf.mxu0
        %v1296 = vadd.f32 0.0, %v1295
        %v1297 = vpop.f32.mrf.mxu0
        %1298 = vmatprep.mubr.f32.mxu0 0.0
        %1299 = vmatmul.mubr.f32.gmra.mxu0 %v1129
        %v1300 = vpop.f32.mrf.mxu0
        %v1301 = vadd.f32 0.0, %v1300
        %v1302 = vpop.f32.mrf.mxu0
        %1303 = vmatprep.mubr.f32.mxu0 0.0
        %1304 = vmatmul.mubr.f32.gmra.mxu0 %v1132
        %v1305 = vpop.f32.mrf.mxu0
        %v1306 = vadd.f32 0.0, %v1305
        %v1307 = vpop.f32.mrf.mxu0
        %1308 = vmatprep.mubr.f32.mxu0 0.0
        %1309 = vmatmul.mubr.f32.gmra.mxu0 %v1135
        %v1310 = vpop.f32.mrf.mxu0
        %v1311 = vadd.f32 0.0, %v1310
        %v1312 = vpop.f32.mrf.mxu0
        %1313 = vmatprep.mubr.f32.mxu0 0.0
        %1314 = vmatmul.mubr.f32.gmra.mxu0 %v1138
        %v1315 = vpop.f32.mrf.mxu0
        %v1316 = vadd.f32 0.0, %v1315
        %v1317 = vpop.f32.mrf.mxu0
        %1318 = vmatprep.mubr.f32.mxu0 0.0
        %1319 = vmatmul.mubr.f32.gmra.mxu0 %v1141
        %v1320 = vpop.f32.mrf.mxu0
        %v1321 = vadd.f32 0.0, %v1320
        %v1322 = vpop.f32.mrf.mxu0
        %1323 = vmatprep.mubr.f32.mxu0 0.0
        %1324 = vmatmul.mubr.f32.gmra.mxu0 %v1144
        %v1325 = vpop.f32.mrf.mxu0
        %v1326 = vadd.f32 0.0, %v1325
        %v1327 = vpop.f32.mrf.mxu0
        %1328 = vmatprep.mubr.f32.mxu0 0.0
        %1329 = vmatmul.mubr.f32.gmra.mxu0 %v1147
        %v1330 = vpop.f32.mrf.mxu0
        %v1331 = vadd.f32 0.0, %v1330
        %v1332 = vpop.f32.mrf.mxu0
        %1333 = vmatprep.mubr.f32.mxu0 0.0
        %1334 = vmatmul.mubr.f32.gmra.mxu0 %v1150
        %v1335 = vpop.f32.mrf.mxu0
        %v1336 = vadd.f32 0.0, %v1335
        %v1337 = vpop.f32.mrf.mxu0
        %1338 = vmatprep.mubr.f32.mxu0 0.0
        %1339 = vmatmul.mubr.f32.gmra.mxu0 %v1153
        %v1340 = vpop.f32.mrf.mxu0
        %v1341 = vadd.f32 0.0, %v1340
        %v1342 = vpop.f32.mrf.mxu0
        %1343 = vmatprep.mubr.f32.mxu0 0.0
        %1344 = vmatmul.mubr.f32.gmra.mxu0 %v1156
        %v1345 = vpop.f32.mrf.mxu0
        %v1346 = vadd.f32 0.0, %v1345
        %v1347 = vpop.f32.mrf.mxu0
        %1348 = vmatprep.mubr.f32.mxu0 0.0
        %1349 = vmatmul.mubr.f32.gmra.mxu0 %v1159
        %v1350 = vpop.f32.mrf.mxu0
        %v1351 = vadd.f32 0.0, %v1350
        %v1352 = vpop.f32.mrf.mxu0
        %1353 = vmatprep.mubr.f32.mxu0 0.0
        %1354 = vmatmul.mubr.f32.gmra.mxu0 %v1162
        %v1355 = vpop.f32.mrf.mxu0
        %v1356 = vadd.f32 0.0, %v1355
        %v1357 = vpop.f32.mrf.mxu0
        %1358 = vmatprep.mubr.f32.mxu0 0.0
        %1359 = vmatmul.mubr.f32.gmra.mxu0 %v1165
        %v1360 = vpop.f32.mrf.mxu0
        %v1361 = vadd.f32 0.0, %v1360
        %v1362 = vpop.f32.mrf.mxu0
        %1363 = vmatprep.mubr.f32.mxu0 0.0
        %1364 = vmatmul.mubr.f32.gmra.mxu0 %v1168
        %v1365 = vpop.f32.mrf.mxu0
        %v1366 = vadd.f32 0.0, %v1365
        %v1367 = vpop.f32.mrf.mxu0
        %1368 = vmatprep.mubr.f32.mxu0 0.0
        %1369 = vmatmul.mubr.f32.gmra.mxu0 %v1171
        %v1370 = vpop.f32.mrf.mxu0
        %v1371 = vadd.f32 0.0, %v1370
        %v1372 = vpop.f32.mrf.mxu0
        %1373 = vmatprep.mubr.f32.mxu0 0.0
        %1374 = vmatmul.mubr.f32.gmra.mxu0 %v1174
        %v1375 = vpop.f32.mrf.mxu0
        %v1376 = vadd.f32 0.0, %v1375
        %v1377 = vpop.f32.mrf.mxu0
        %1378 = vmatprep.mubr.f32.mxu0 0.0
        %1379 = vmatmul.mubr.f32.gmra.mxu0 %v1177
        %v1380 = vpop.f32.mrf.mxu0
        %v1381 = vadd.f32 0.0, %v1380
        %v1382 = vpop.f32.mrf.mxu0
        %1383 = vmatprep.mubr.f32.mxu0 0.0
        %1384 = vmatmul.mubr.f32.gmra.mxu0 %v1180
        %v1385 = vpop.f32.mrf.mxu0
        %v1386 = vadd.f32 0.0, %v1385
        %v1387 = vpop.f32.mrf.mxu0
        %1388 = vmatprep.mubr.f32.mxu0 0.0
        %1389 = vmatmul.mubr.f32.gmra.mxu0 %v1183
        %v1390 = vpop.f32.mrf.mxu0
        %v1391 = vadd.f32 0.0, %v1390
        %v1392 = vpop.f32.mrf.mxu0
        %1393 = vmatprep.mubr.f32.mxu0 0.0
        %1394 = vmatmul.mubr.f32.gmra.mxu0 %v1186
        %v1395 = vpop.f32.mrf.mxu0
        %v1396 = vadd.f32 0.0, %v1395
        %v1397 = vpop.f32.mrf.mxu0
        %1398 = vmatprep.mubr.f32.mxu0 0.0
        %1399 = vmatmul.mubr.f32.gmra.mxu0 %v1189
        %v1400 = vpop.f32.mrf.mxu0
        %v1401 = vadd.f32 0.0, %v1400
        %v1402 = vpop.f32.mrf.mxu0
        %1403 = vmatprep.mubr.f32.mxu0 0.0
        %1404 = vmatmul.mubr.f32.gmra.mxu0 %v1192
        %v1405 = vpop.f32.mrf.mxu0
        %v1406 = vadd.f32 0.0, %v1405
        %v1407 = vpop.f32.mrf.mxu0
        %1408 = vmatprep.mubr.f32.mxu0 0.0
        %1409 = vmatmul.mubr.f32.gmra.mxu0 %v1195
        %v1410 = vpop.f32.mrf.mxu0
        %v1411 = vadd.f32 0.0, %v1410
        %v1412 = vpop.f32.mrf.mxu0
        %1413 = vmatprep.mubr.f32.mxu0 0.0
        %1414 = vmatmul.mubr.f32.gmra.mxu0 %v1198
        %v1415 = vpop.f32.mrf.mxu0
        %v1416 = vadd.f32 0.0, %v1415
        %v1417 = vpop.f32.mrf.mxu0
        %1418 = vmatprep.mubr.f32.mxu0 0.0
        %1419 = vmatmul.mubr.f32.gmra.mxu0 %v1201
        %v1420 = vpop.f32.mrf.mxu0
        %v1421 = vadd.f32 0.0, %v1420
        %v1422 = vpop.f32.mrf.mxu0
        %1423 = vmatprep.mubr.f32.mxu0 0.0
        %1424 = vmatmul.mubr.f32.gmra.mxu0 %v1204
        %v1425 = vpop.f32.mrf.mxu0
        %v1426 = vadd.f32 0.0, %v1425
        %v1427 = vpop.f32.mrf.mxu0
        %1428 = vmatprep.mubr.f32.mxu0 0.0
        %1429 = vmatmul.mubr.f32.gmra.mxu0 %v1207
        %v1430 = vpop.f32.mrf.mxu0
        %v1431 = vadd.f32 0.0, %v1430
        %v1432 = vpop.f32.mrf.mxu0
        %1433 = vdwg.mxu0
        %v1435 = vsel %vm1112, %v629, 0
        %v1438 = vsel %vm1112, %v634, 0
        %v1441 = vsel %vm1112, %v639, 0
        %v1444 = vsel %vm1112, %v644, 0
        %v1447 = vsel %vm1112, %v649, 0
        %v1450 = vsel %vm1112, %v654, 0
        %v1453 = vsel %vm1112, %v659, 0
        %v1456 = vsel %vm1112, %v664, 0
        %v1459 = vsel %vm1112, %v669, 0
        %v1462 = vsel %vm1112, %v674, 0
        %v1465 = vsel %vm1112, %v679, 0
        %v1468 = vsel %vm1112, %v684, 0
        %v1471 = vsel %vm1112, %v689, 0
        %v1474 = vsel %vm1112, %v694, 0
        %v1477 = vsel %vm1112, %v699, 0
        %v1480 = vsel %vm1112, %v704, 0
        %v1483 = vsel %vm1112, %v709, 0
        %v1486 = vsel %vm1112, %v714, 0
        %v1489 = vsel %vm1112, %v719, 0
        %v1492 = vsel %vm1112, %v724, 0
        %v1495 = vsel %vm1112, %v729, 0
        %v1498 = vsel %vm1112, %v734, 0
        %v1501 = vsel %vm1112, %v739, 0
        %v1504 = vsel %vm1112, %v744, 0
        %v1507 = vsel %vm1112, %v749, 0
        %v1510 = vsel %vm1112, %v754, 0
        %v1513 = vsel %vm1112, %v759, 0
        %v1516 = vsel %vm1112, %v764, 0
        %v1519 = vsel %vm1112, %v769, 0
        %v1522 = vsel %vm1112, %v774, 0
        %v1525 = vsel %vm1112, %v779, 0
        %v1528 = vsel %vm1112, %v784, 0
        %1530 = vmatprep.subr.mxu0 0.0
        %1531 = vmatpush1.msra.mxu0 0.0
        %1532 = vmatprep.subr.mxu0 0.0
        %1533 = vmatpush1.msra.mxu0 0.0
        %1534 = vmatprep.subr.mxu0 0.0
        %1535 = vmatpush1.msra.mxu0 0.0
        %1536 = vmatprep.subr.mxu0 0.0
        %1537 = vmatpush1.msra.mxu0 0.0
        %1538 = vmatprep.subr.mxu0 0.0
        %1539 = vmatpush1.msra.mxu0 0.0
        %1540 = vmatprep.subr.mxu0 0.0
        %1541 = vmatpush1.msra.mxu0 0.0
        %1542 = vmatprep.subr.mxu0 0.0
        %1543 = vmatpush1.msra.mxu0 0.0
        %1544 = vmatprep.subr.mxu0 0.0
        %1545 = vmatpush1.msra.mxu0 0.0
        %1546 = vmatprep.subr.mxu0 0.0
        %1547 = vmatpush1.msra.mxu0 0.0
        %1548 = vmatprep.subr.mxu0 0.0
        %1549 = vmatpush1.msra.mxu0 0.0
        %1550 = vmatprep.subr.mxu0 0.0
        %1551 = vmatpush1.msra.mxu0 0.0
        %1552 = vmatprep.subr.mxu0 0.0
        %1553 = vmatpush1.msra.mxu0 0.0
        %1554 = vmatprep.subr.mxu0 0.0
        %1555 = vmatpush1.msra.mxu0 0.0
        %1556 = vmatprep.subr.mxu0 0.0
        %1557 = vmatpush1.msra.mxu0 0.0
        %1558 = vmatprep.subr.mxu0 0.0
        %1559 = vmatpush1.msra.mxu0 %v1108
        %1560 = vmatprep.subr.mxu0 0.0
        %1561 = vmatpush1.msra.mxu0 %v1107
        %1562 = vmatprep.subr.mxu0 0.0
        %1563 = vmatpush2.msra.mxu0 0.0
        %1564 = vmatprep.subr.mxu0 0.0
        %1565 = vmatpush2.msra.mxu0 0.0
        %1566 = vmatprep.subr.mxu0 0.0
        %1567 = vmatpush2.msra.mxu0 0.0
        %1568 = vmatprep.subr.mxu0 0.0
        %1569 = vmatpush2.msra.mxu0 0.0
        %1570 = vmatprep.subr.mxu0 0.0
        %1571 = vmatpush2.msra.mxu0 0.0
        %1572 = vmatprep.subr.mxu0 0.0
        %1573 = vmatpush2.msra.mxu0 0.0
        %1574 = vmatprep.subr.mxu0 0.0
        %1575 = vmatpush2.msra.mxu0 0.0
        %1576 = vmatprep.subr.mxu0 0.0
        %1577 = vmatpush2.msra.mxu0 0.0
        %1578 = vmatprep.subr.mxu0 0.0
        %1579 = vmatpush2.msra.mxu0 0.0
        %1580 = vmatprep.subr.mxu0 0.0
        %1581 = vmatpush2.msra.mxu0 0.0
        %1582 = vmatprep.subr.mxu0 0.0
        %1583 = vmatpush2.msra.mxu0 0.0
        %1584 = vmatprep.subr.mxu0 0.0
        %1585 = vmatpush2.msra.mxu0 0.0
        %1586 = vmatprep.subr.mxu0 0.0
        %1587 = vmatpush2.msra.mxu0 0.0
        %1588 = vmatprep.subr.mxu0 0.0
        %1589 = vmatpush2.msra.mxu0 0.0
        %1590 = vmatprep.subr.mxu0 0.0
        %1591 = vmatpush2.msra.mxu0 0.0
        %1592 = vmatprep.subr.mxu0 0.0
        %1593 = vmatpush2.msra.mxu0 0.0
        %1594 = vmatprep.mubr.f32.mxu0 0.0
        %1595 = vmatmul.mubr.f32.gmra.mxu0 %v1435
        %v1596 = vpop.f32.mrf.mxu0
        %v1597 = vadd.f32 %v1276, %v1596
        %v1598 = vpop.f32.mrf.mxu0
        %1599 = vmatprep.mubr.f32.mxu0 0.0
        %1600 = vmatmul.mubr.f32.gmra.mxu0 %v1438
        %v1601 = vpop.f32.mrf.mxu0
        %v1602 = vadd.f32 %v1281, %v1601
        %v1603 = vpop.f32.mrf.mxu0
        %1604 = vmatprep.mubr.f32.mxu0 0.0
        %1605 = vmatmul.mubr.f32.gmra.mxu0 %v1441
        %v1606 = vpop.f32.mrf.mxu0
        %v1607 = vadd.f32 %v1286, %v1606
        %v1608 = vpop.f32.mrf.mxu0
        %1609 = vmatprep.mubr.f32.mxu0 0.0
        %1610 = vmatmul.mubr.f32.gmra.mxu0 %v1444
        %v1611 = vpop.f32.mrf.mxu0
        %v1612 = vadd.f32 %v1291, %v1611
        %v1613 = vpop.f32.mrf.mxu0
        %1614 = vmatprep.mubr.f32.mxu0 0.0
        %1615 = vmatmul.mubr.f32.gmra.mxu0 %v1447
        %v1616 = vpop.f32.mrf.mxu0
        %v1617 = vadd.f32 %v1296, %v1616
        %v1618 = vpop.f32.mrf.mxu0
        %1619 = vmatprep.mubr.f32.mxu0 0.0
        %1620 = vmatmul.mubr.f32.gmra.mxu0 %v1450
        %v1621 = vpop.f32.mrf.mxu0
        %v1622 = vadd.f32 %v1301, %v1621
        %v1623 = vpop.f32.mrf.mxu0
        %1624 = vmatprep.mubr.f32.mxu0 0.0
        %1625 = vmatmul.mubr.f32.gmra.mxu0 %v1453
        %v1626 = vpop.f32.mrf.mxu0
        %v1627 = vadd.f32 %v1306, %v1626
        %v1628 = vpop.f32.mrf.mxu0
        %1629 = vmatprep.mubr.f32.mxu0 0.0
        %1630 = vmatmul.mubr.f32.gmra.mxu0 %v1456
        %v1631 = vpop.f32.mrf.mxu0
        %v1632 = vadd.f32 %v1311, %v1631
        %v1633 = vpop.f32.mrf.mxu0
        %1634 = vmatprep.mubr.f32.mxu0 0.0
        %1635 = vmatmul.mubr.f32.gmra.mxu0 %v1459
        %v1636 = vpop.f32.mrf.mxu0
        %v1637 = vadd.f32 %v1316, %v1636
        %v1638 = vpop.f32.mrf.mxu0
        %1639 = vmatprep.mubr.f32.mxu0 0.0
        %1640 = vmatmul.mubr.f32.gmra.mxu0 %v1462
        %v1641 = vpop.f32.mrf.mxu0
        %v1642 = vadd.f32 %v1321, %v1641
        %v1643 = vpop.f32.mrf.mxu0
        %1644 = vmatprep.mubr.f32.mxu0 0.0
        %1645 = vmatmul.mubr.f32.gmra.mxu0 %v1465
        %v1646 = vpop.f32.mrf.mxu0
        %v1647 = vadd.f32 %v1326, %v1646
        %v1648 = vpop.f32.mrf.mxu0
        %1649 = vmatprep.mubr.f32.mxu0 0.0
        %1650 = vmatmul.mubr.f32.gmra.mxu0 %v1468
        %v1651 = vpop.f32.mrf.mxu0
        %v1652 = vadd.f32 %v1331, %v1651
        %v1653 = vpop.f32.mrf.mxu0
        %1654 = vmatprep.mubr.f32.mxu0 0.0
        %1655 = vmatmul.mubr.f32.gmra.mxu0 %v1471
        %v1656 = vpop.f32.mrf.mxu0
        %v1657 = vadd.f32 %v1336, %v1656
        %v1658 = vpop.f32.mrf.mxu0
        %1659 = vmatprep.mubr.f32.mxu0 0.0
        %1660 = vmatmul.mubr.f32.gmra.mxu0 %v1474
        %v1661 = vpop.f32.mrf.mxu0
        %v1662 = vadd.f32 %v1341, %v1661
        %v1663 = vpop.f32.mrf.mxu0
        %1664 = vmatprep.mubr.f32.mxu0 0.0
        %1665 = vmatmul.mubr.f32.gmra.mxu0 %v1477
        %v1666 = vpop.f32.mrf.mxu0
        %v1667 = vadd.f32 %v1346, %v1666
        %v1668 = vpop.f32.mrf.mxu0
        %1669 = vmatprep.mubr.f32.mxu0 0.0
        %1670 = vmatmul.mubr.f32.gmra.mxu0 %v1480
        %v1671 = vpop.f32.mrf.mxu0
        %v1672 = vadd.f32 %v1351, %v1671
        %v1673 = vpop.f32.mrf.mxu0
        %1674 = vmatprep.mubr.f32.mxu0 0.0
        %1675 = vmatmul.mubr.f32.gmra.mxu0 %v1483
        %v1676 = vpop.f32.mrf.mxu0
        %v1677 = vadd.f32 %v1356, %v1676
        %v1678 = vpop.f32.mrf.mxu0
        %1679 = vmatprep.mubr.f32.mxu0 0.0
        %1680 = vmatmul.mubr.f32.gmra.mxu0 %v1486
        %v1681 = vpop.f32.mrf.mxu0
        %v1682 = vadd.f32 %v1361, %v1681
        %v1683 = vpop.f32.mrf.mxu0
        %1684 = vmatprep.mubr.f32.mxu0 0.0
        %1685 = vmatmul.mubr.f32.gmra.mxu0 %v1489
        %v1686 = vpop.f32.mrf.mxu0
        %v1687 = vadd.f32 %v1366, %v1686
        %v1688 = vpop.f32.mrf.mxu0
        %1689 = vmatprep.mubr.f32.mxu0 0.0
        %1690 = vmatmul.mubr.f32.gmra.mxu0 %v1492
        %v1691 = vpop.f32.mrf.mxu0
        %v1692 = vadd.f32 %v1371, %v1691
        %v1693 = vpop.f32.mrf.mxu0
        %1694 = vmatprep.mubr.f32.mxu0 0.0
        %1695 = vmatmul.mubr.f32.gmra.mxu0 %v1495
        %v1696 = vpop.f32.mrf.mxu0
        %v1697 = vadd.f32 %v1376, %v1696
        %v1698 = vpop.f32.mrf.mxu0
        %1699 = vmatprep.mubr.f32.mxu0 0.0
        %1700 = vmatmul.mubr.f32.gmra.mxu0 %v1498
        %v1701 = vpop.f32.mrf.mxu0
        %v1702 = vadd.f32 %v1381, %v1701
        %v1703 = vpop.f32.mrf.mxu0
        %1704 = vmatprep.mubr.f32.mxu0 0.0
        %1705 = vmatmul.mubr.f32.gmra.mxu0 %v1501
        %v1706 = vpop.f32.mrf.mxu0
        %v1707 = vadd.f32 %v1386, %v1706
        %v1708 = vpop.f32.mrf.mxu0
        %1709 = vmatprep.mubr.f32.mxu0 0.0
        %1710 = vmatmul.mubr.f32.gmra.mxu0 %v1504
        %v1711 = vpop.f32.mrf.mxu0
        %v1712 = vadd.f32 %v1391, %v1711
        %v1713 = vpop.f32.mrf.mxu0
        %1714 = vmatprep.mubr.f32.mxu0 0.0
        %1715 = vmatmul.mubr.f32.gmra.mxu0 %v1507
        %v1716 = vpop.f32.mrf.mxu0
        %v1717 = vadd.f32 %v1396, %v1716
        %v1718 = vpop.f32.mrf.mxu0
        %1719 = vmatprep.mubr.f32.mxu0 0.0
        %1720 = vmatmul.mubr.f32.gmra.mxu0 %v1510
        %v1721 = vpop.f32.mrf.mxu0
        %v1722 = vadd.f32 %v1401, %v1721
        %v1723 = vpop.f32.mrf.mxu0
        %1724 = vmatprep.mubr.f32.mxu0 0.0
        %1725 = vmatmul.mubr.f32.gmra.mxu0 %v1513
        %v1726 = vpop.f32.mrf.mxu0
        %v1727 = vadd.f32 %v1406, %v1726
        %v1728 = vpop.f32.mrf.mxu0
        %1729 = vmatprep.mubr.f32.mxu0 0.0
        %1730 = vmatmul.mubr.f32.gmra.mxu0 %v1516
        %v1731 = vpop.f32.mrf.mxu0
        %v1732 = vadd.f32 %v1411, %v1731
        %v1733 = vpop.f32.mrf.mxu0
        %1734 = vmatprep.mubr.f32.mxu0 0.0
        %1735 = vmatmul.mubr.f32.gmra.mxu0 %v1519
        %v1736 = vpop.f32.mrf.mxu0
        %v1737 = vadd.f32 %v1416, %v1736
        %v1738 = vpop.f32.mrf.mxu0
        %1739 = vmatprep.mubr.f32.mxu0 0.0
        %1740 = vmatmul.mubr.f32.gmra.mxu0 %v1522
        %v1741 = vpop.f32.mrf.mxu0
        %v1742 = vadd.f32 %v1421, %v1741
        %v1743 = vpop.f32.mrf.mxu0
        %1744 = vmatprep.mubr.f32.mxu0 0.0
        %1745 = vmatmul.mubr.f32.gmra.mxu0 %v1525
        %v1746 = vpop.f32.mrf.mxu0
        %v1747 = vadd.f32 %v1426, %v1746
        %v1748 = vpop.f32.mrf.mxu0
        %1749 = vmatprep.mubr.f32.mxu0 0.0
        %1750 = vmatmul.mubr.f32.gmra.mxu0 %v1528
        %v1751 = vpop.f32.mrf.mxu0
        %v1752 = vadd.f32 %v1431, %v1751
        %v1753 = vpop.f32.mrf.mxu0
        %1754 = vdwg.mxu0
        %s1755 = scalar_lea.vmem %s2, 32
        %v1756 = vld [vmem:[%s1755] sm:$0xff]
        %v1757 = vld [vmem:[%s1755 + $0x8] sm:$0xff]
        %v1759 = vsel %vm1112, %v949, 0
        %v1762 = vsel %vm1112, %v954, 0
        %v1765 = vsel %vm1112, %v959, 0
        %v1768 = vsel %vm1112, %v964, 0
        %v1771 = vsel %vm1112, %v969, 0
        %v1774 = vsel %vm1112, %v974, 0
        %v1777 = vsel %vm1112, %v979, 0
        %v1780 = vsel %vm1112, %v984, 0
        %v1783 = vsel %vm1112, %v989, 0
        %v1786 = vsel %vm1112, %v994, 0
        %v1789 = vsel %vm1112, %v999, 0
        %v1792 = vsel %vm1112, %v1004, 0
        %v1795 = vsel %vm1112, %v1009, 0
        %v1798 = vsel %vm1112, %v1014, 0
        %v1801 = vsel %vm1112, %v1019, 0
        %v1804 = vsel %vm1112, %v1024, 0
        %v1807 = vsel %vm1112, %v1029, 0
        %v1810 = vsel %vm1112, %v1034, 0
        %v1813 = vsel %vm1112, %v1039, 0
        %v1816 = vsel %vm1112, %v1044, 0
        %v1819 = vsel %vm1112, %v1049, 0
        %v1822 = vsel %vm1112, %v1054, 0
        %v1825 = vsel %vm1112, %v1059, 0
        %v1828 = vsel %vm1112, %v1064, 0
        %v1831 = vsel %vm1112, %v1069, 0
        %v1834 = vsel %vm1112, %v1074, 0
        %v1837 = vsel %vm1112, %v1079, 0
        %v1840 = vsel %vm1112, %v1084, 0
        %v1843 = vsel %vm1112, %v1089, 0
        %v1846 = vsel %vm1112, %v1094, 0
        %v1849 = vsel %vm1112, %v1099, 0
        %v1852 = vsel %vm1112, %v1104, 0
        %1854 = vmatprep.subr.mxu0 0.0
        %1855 = vmatpush1.msra.mxu0 0.0
        %1856 = vmatprep.subr.mxu0 0.0
        %1857 = vmatpush1.msra.mxu0 0.0
        %1858 = vmatprep.subr.mxu0 0.0
        %1859 = vmatpush1.msra.mxu0 0.0
        %1860 = vmatprep.subr.mxu0 0.0
        %1861 = vmatpush1.msra.mxu0 0.0
        %1862 = vmatprep.subr.mxu0 0.0
        %1863 = vmatpush1.msra.mxu0 0.0
        %1864 = vmatprep.subr.mxu0 0.0
        %1865 = vmatpush1.msra.mxu0 0.0
        %1866 = vmatprep.subr.mxu0 0.0
        %1867 = vmatpush1.msra.mxu0 0.0
        %1868 = vmatprep.subr.mxu0 0.0
        %1869 = vmatpush1.msra.mxu0 0.0
        %1870 = vmatprep.subr.mxu0 0.0
        %1871 = vmatpush1.msra.mxu0 0.0
        %1872 = vmatprep.subr.mxu0 0.0
        %1873 = vmatpush1.msra.mxu0 0.0
        %1874 = vmatprep.subr.mxu0 0.0
        %1875 = vmatpush1.msra.mxu0 0.0
        %1876 = vmatprep.subr.mxu0 0.0
        %1877 = vmatpush1.msra.mxu0 0.0
        %1878 = vmatprep.subr.mxu0 0.0
        %1879 = vmatpush1.msra.mxu0 0.0
        %1880 = vmatprep.subr.mxu0 0.0
        %1881 = vmatpush1.msra.mxu0 0.0
        %1882 = vmatprep.subr.mxu0 0.0
        %1883 = vmatpush1.msra.mxu0 %v1757
        %1884 = vmatprep.subr.mxu0 0.0
        %1885 = vmatpush1.msra.mxu0 %v1756
        %1886 = vmatprep.subr.mxu0 0.0
        %1887 = vmatpush2.msra.mxu0 0.0
        %1888 = vmatprep.subr.mxu0 0.0
        %1889 = vmatpush2.msra.mxu0 0.0
        %1890 = vmatprep.subr.mxu0 0.0
        %1891 = vmatpush2.msra.mxu0 0.0
        %1892 = vmatprep.subr.mxu0 0.0
        %1893 = vmatpush2.msra.mxu0 0.0
        %1894 = vmatprep.subr.mxu0 0.0
        %1895 = vmatpush2.msra.mxu0 0.0
        %1896 = vmatprep.subr.mxu0 0.0
        %1897 = vmatpush2.msra.mxu0 0.0
        %1898 = vmatprep.subr.mxu0 0.0
        %1899 = vmatpush2.msra.mxu0 0.0
        %1900 = vmatprep.subr.mxu0 0.0
        %1901 = vmatpush2.msra.mxu0 0.0
        %1902 = vmatprep.subr.mxu0 0.0
        %1903 = vmatpush2.msra.mxu0 0.0
        %1904 = vmatprep.subr.mxu0 0.0
        %1905 = vmatpush2.msra.mxu0 0.0
        %1906 = vmatprep.subr.mxu0 0.0
        %1907 = vmatpush2.msra.mxu0 0.0
        %1908 = vmatprep.subr.mxu0 0.0
        %1909 = vmatpush2.msra.mxu0 0.0
        %1910 = vmatprep.subr.mxu0 0.0
        %1911 = vmatpush2.msra.mxu0 0.0
        %1912 = vmatprep.subr.mxu0 0.0
        %1913 = vmatpush2.msra.mxu0 0.0
        %1914 = vmatprep.subr.mxu0 0.0
        %1915 = vmatpush2.msra.mxu0 0.0
        %1916 = vmatprep.subr.mxu0 0.0
        %1917 = vmatpush2.msra.mxu0 0.0
        %1918 = vmatprep.mubr.f32.mxu0 0.0
        %1919 = vmatmul.mubr.f32.gmra.mxu0 %v1759
        %v1920 = vpop.f32.mrf.mxu0
        %v1921 = vadd.f32 0.0, %v1920
        %v1922 = vpop.f32.mrf.mxu0
        %1923 = vmatprep.mubr.f32.mxu0 0.0
        %1924 = vmatmul.mubr.f32.gmra.mxu0 %v1762
        %v1925 = vpop.f32.mrf.mxu0
        %v1926 = vadd.f32 0.0, %v1925
        %v1927 = vpop.f32.mrf.mxu0
        %1928 = vmatprep.mubr.f32.mxu0 0.0
        %1929 = vmatmul.mubr.f32.gmra.mxu0 %v1765
        %v1930 = vpop.f32.mrf.mxu0
        %v1931 = vadd.f32 0.0, %v1930
        %v1932 = vpop.f32.mrf.mxu0
        %1933 = vmatprep.mubr.f32.mxu0 0.0
        %1934 = vmatmul.mubr.f32.gmra.mxu0 %v1768
        %v1935 = vpop.f32.mrf.mxu0
        %v1936 = vadd.f32 0.0, %v1935
        %v1937 = vpop.f32.mrf.mxu0
        %1938 = vmatprep.mubr.f32.mxu0 0.0
        %1939 = vmatmul.mubr.f32.gmra.mxu0 %v1771
        %v1940 = vpop.f32.mrf.mxu0
        %v1941 = vadd.f32 0.0, %v1940
        %v1942 = vpop.f32.mrf.mxu0
        %1943 = vmatprep.mubr.f32.mxu0 0.0
        %1944 = vmatmul.mubr.f32.gmra.mxu0 %v1774
        %v1945 = vpop.f32.mrf.mxu0
        %v1946 = vadd.f32 0.0, %v1945
        %v1947 = vpop.f32.mrf.mxu0
        %1948 = vmatprep.mubr.f32.mxu0 0.0
        %1949 = vmatmul.mubr.f32.gmra.mxu0 %v1777
        %v1950 = vpop.f32.mrf.mxu0
        %v1951 = vadd.f32 0.0, %v1950
        %v1952 = vpop.f32.mrf.mxu0
        %1953 = vmatprep.mubr.f32.mxu0 0.0
        %1954 = vmatmul.mubr.f32.gmra.mxu0 %v1780
        %v1955 = vpop.f32.mrf.mxu0
        %v1956 = vadd.f32 0.0, %v1955
        %v1957 = vpop.f32.mrf.mxu0
        %1958 = vmatprep.mubr.f32.mxu0 0.0
        %1959 = vmatmul.mubr.f32.gmra.mxu0 %v1783
        %v1960 = vpop.f32.mrf.mxu0
        %v1961 = vadd.f32 0.0, %v1960
        %v1962 = vpop.f32.mrf.mxu0
        %1963 = vmatprep.mubr.f32.mxu0 0.0
        %1964 = vmatmul.mubr.f32.gmra.mxu0 %v1786
        %v1965 = vpop.f32.mrf.mxu0
        %v1966 = vadd.f32 0.0, %v1965
        %v1967 = vpop.f32.mrf.mxu0
        %1968 = vmatprep.mubr.f32.mxu0 0.0
        %1969 = vmatmul.mubr.f32.gmra.mxu0 %v1789
        %v1970 = vpop.f32.mrf.mxu0
        %v1971 = vadd.f32 0.0, %v1970
        %v1972 = vpop.f32.mrf.mxu0
        %1973 = vmatprep.mubr.f32.mxu0 0.0
        %1974 = vmatmul.mubr.f32.gmra.mxu0 %v1792
        %v1975 = vpop.f32.mrf.mxu0
        %v1976 = vadd.f32 0.0, %v1975
        %v1977 = vpop.f32.mrf.mxu0
        %1978 = vmatprep.mubr.f32.mxu0 0.0
        %1979 = vmatmul.mubr.f32.gmra.mxu0 %v1795
        %v1980 = vpop.f32.mrf.mxu0
        %v1981 = vadd.f32 0.0, %v1980
        %v1982 = vpop.f32.mrf.mxu0
        %1983 = vmatprep.mubr.f32.mxu0 0.0
        %1984 = vmatmul.mubr.f32.gmra.mxu0 %v1798
        %v1985 = vpop.f32.mrf.mxu0
        %v1986 = vadd.f32 0.0, %v1985
        %v1987 = vpop.f32.mrf.mxu0
        %1988 = vmatprep.mubr.f32.mxu0 0.0
        %1989 = vmatmul.mubr.f32.gmra.mxu0 %v1801
        %v1990 = vpop.f32.mrf.mxu0
        %v1991 = vadd.f32 0.0, %v1990
        %v1992 = vpop.f32.mrf.mxu0
        %1993 = vmatprep.mubr.f32.mxu0 0.0
        %1994 = vmatmul.mubr.f32.gmra.mxu0 %v1804
        %v1995 = vpop.f32.mrf.mxu0
        %v1996 = vadd.f32 0.0, %v1995
        %v1997 = vpop.f32.mrf.mxu0
        %1998 = vmatprep.mubr.f32.mxu0 0.0
        %1999 = vmatmul.mubr.f32.gmra.mxu0 %v1807
        %v2000 = vpop.f32.mrf.mxu0
        %v2001 = vadd.f32 0.0, %v2000
        %v2002 = vpop.f32.mrf.mxu0
        %2003 = vmatprep.mubr.f32.mxu0 0.0
        %2004 = vmatmul.mubr.f32.gmra.mxu0 %v1810
        %v2005 = vpop.f32.mrf.mxu0
        %v2006 = vadd.f32 0.0, %v2005
        %v2007 = vpop.f32.mrf.mxu0
        %2008 = vmatprep.mubr.f32.mxu0 0.0
        %2009 = vmatmul.mubr.f32.gmra.mxu0 %v1813
        %v2010 = vpop.f32.mrf.mxu0
        %v2011 = vadd.f32 0.0, %v2010
        %v2012 = vpop.f32.mrf.mxu0
        %2013 = vmatprep.mubr.f32.mxu0 0.0
        %2014 = vmatmul.mubr.f32.gmra.mxu0 %v1816
        %v2015 = vpop.f32.mrf.mxu0
        %v2016 = vadd.f32 0.0, %v2015
        %v2017 = vpop.f32.mrf.mxu0
        %2018 = vmatprep.mubr.f32.mxu0 0.0
        %2019 = vmatmul.mubr.f32.gmra.mxu0 %v1819
        %v2020 = vpop.f32.mrf.mxu0
        %v2021 = vadd.f32 0.0, %v2020
        %v2022 = vpop.f32.mrf.mxu0
        %2023 = vmatprep.mubr.f32.mxu0 0.0
        %2024 = vmatmul.mubr.f32.gmra.mxu0 %v1822
        %v2025 = vpop.f32.mrf.mxu0
        %v2026 = vadd.f32 0.0, %v2025
        %v2027 = vpop.f32.mrf.mxu0
        %2028 = vmatprep.mubr.f32.mxu0 0.0
        %2029 = vmatmul.mubr.f32.gmra.mxu0 %v1825
        %v2030 = vpop.f32.mrf.mxu0
        %v2031 = vadd.f32 0.0, %v2030
        %v2032 = vpop.f32.mrf.mxu0
        %2033 = vmatprep.mubr.f32.mxu0 0.0
        %2034 = vmatmul.mubr.f32.gmra.mxu0 %v1828
        %v2035 = vpop.f32.mrf.mxu0
        %v2036 = vadd.f32 0.0, %v2035
        %v2037 = vpop.f32.mrf.mxu0
        %2038 = vmatprep.mubr.f32.mxu0 0.0
        %2039 = vmatmul.mubr.f32.gmra.mxu0 %v1831
        %v2040 = vpop.f32.mrf.mxu0
        %v2041 = vadd.f32 0.0, %v2040
        %v2042 = vpop.f32.mrf.mxu0
        %2043 = vmatprep.mubr.f32.mxu0 0.0
        %2044 = vmatmul.mubr.f32.gmra.mxu0 %v1834
        %v2045 = vpop.f32.mrf.mxu0
        %v2046 = vadd.f32 0.0, %v2045
        %v2047 = vpop.f32.mrf.mxu0
        %2048 = vmatprep.mubr.f32.mxu0 0.0
        %2049 = vmatmul.mubr.f32.gmra.mxu0 %v1837
        %v2050 = vpop.f32.mrf.mxu0
        %v2051 = vadd.f32 0.0, %v2050
        %v2052 = vpop.f32.mrf.mxu0
        %2053 = vmatprep.mubr.f32.mxu0 0.0
        %2054 = vmatmul.mubr.f32.gmra.mxu0 %v1840
        %v2055 = vpop.f32.mrf.mxu0
        %v2056 = vadd.f32 0.0, %v2055
        %v2057 = vpop.f32.mrf.mxu0
        %2058 = vmatprep.mubr.f32.mxu0 0.0
        %2059 = vmatmul.mubr.f32.gmra.mxu0 %v1843
        %v2060 = vpop.f32.mrf.mxu0
        %v2061 = vadd.f32 0.0, %v2060
        %v2062 = vpop.f32.mrf.mxu0
        %2063 = vmatprep.mubr.f32.mxu0 0.0
        %2064 = vmatmul.mubr.f32.gmra.mxu0 %v1846
        %v2065 = vpop.f32.mrf.mxu0
        %v2066 = vadd.f32 0.0, %v2065
        %v2067 = vpop.f32.mrf.mxu0
        %2068 = vmatprep.mubr.f32.mxu0 0.0
        %2069 = vmatmul.mubr.f32.gmra.mxu0 %v1849
        %v2070 = vpop.f32.mrf.mxu0
        %v2071 = vadd.f32 0.0, %v2070
        %v2072 = vpop.f32.mrf.mxu0
        %2073 = vmatprep.mubr.f32.mxu0 0.0
        %2074 = vmatmul.mubr.f32.gmra.mxu0 %v1852
        %v2075 = vpop.f32.mrf.mxu0
        %v2076 = vadd.f32 0.0, %v2075
        %v2077 = vpop.f32.mrf.mxu0
        %2078 = vdwg.mxu0
        %v2079 = vadd.f32 %v1597, %v1921
        %v2080 = vadd.f32 %v1602, %v1926
        %v2081 = vadd.f32 %v1607, %v1931
        %v2082 = vadd.f32 %v1612, %v1936
        %v2083 = vadd.f32 %v1617, %v1941
        %v2084 = vadd.f32 %v1622, %v1946
        %v2085 = vadd.f32 %v1627, %v1951
        %v2086 = vadd.f32 %v1632, %v1956
        %v2087 = vadd.f32 %v1637, %v1961
        %v2088 = vadd.f32 %v1642, %v1966
        %v2089 = vadd.f32 %v1647, %v1971
        %v2090 = vadd.f32 %v1652, %v1976
        %v2091 = vadd.f32 %v1657, %v1981
        %v2092 = vadd.f32 %v1662, %v1986
        %v2093 = vadd.f32 %v1667, %v1991
        %v2094 = vadd.f32 %v1672, %v1996
        %v2095 = vadd.f32 %v1677, %v2001
        %v2096 = vadd.f32 %v1682, %v2006
        %v2097 = vadd.f32 %v1687, %v2011
        %v2098 = vadd.f32 %v1692, %v2016
        %v2099 = vadd.f32 %v1697, %v2021
        %v2100 = vadd.f32 %v1702, %v2026
        %v2101 = vadd.f32 %v1707, %v2031
        %v2102 = vadd.f32 %v1712, %v2036
        %v2103 = vadd.f32 %v1717, %v2041
        %v2104 = vadd.f32 %v1722, %v2046
        %v2105 = vadd.f32 %v1727, %v2051
        %v2106 = vadd.f32 %v1732, %v2056
        %v2107 = vadd.f32 %v1737, %v2061
        %v2108 = vadd.f32 %v1742, %v2066
        %v2109 = vadd.f32 %v1747, %v2071
        %v2110 = vadd.f32 %v1752, %v2076
        %vm2111 = vcmask 261120
        %2112 = vst.msk [vmem:[%s163] sm:$0xff] %vm2111, %v2079
        %2113 = vst.msk [vmem:[%s163 + $0x8] sm:$0xff] %vm2111, %v2080
        %2114 = vst.msk [vmem:[%s163 + $0x10] sm:$0xff] %vm2111, %v2081
        %2115 = vst.msk [vmem:[%s163 + $0x18] sm:$0xff] %vm2111, %v2082
        %2116 = vst.msk [vmem:[%s163 + $0x20] sm:$0xff] %vm2111, %v2083
        %2117 = vst.msk [vmem:[%s163 + $0x28] sm:$0xff] %vm2111, %v2084
        %2118 = vst.msk [vmem:[%s163 + $0x30] sm:$0xff] %vm2111, %v2085
        %2119 = vst.msk [vmem:[%s163 + $0x38] sm:$0xff] %vm2111, %v2086
        %2120 = vst.msk [vmem:[%s163 + $0x40] sm:$0xff] %vm2111, %v2087
        %2121 = vst.msk [vmem:[%s163 + $0x48] sm:$0xff] %vm2111, %v2088
        %2122 = vst.msk [vmem:[%s163 + $0x50] sm:$0xff] %vm2111, %v2089
        %2123 = vst.msk [vmem:[%s163 + $0x58] sm:$0xff] %vm2111, %v2090
        %2124 = vst.msk [vmem:[%s163 + $0x60] sm:$0xff] %vm2111, %v2091
        %2125 = vst.msk [vmem:[%s163 + $0x68] sm:$0xff] %vm2111, %v2092
        %2126 = vst.msk [vmem:[%s163 + $0x70] sm:$0xff] %vm2111, %v2093
        %2127 = vst.msk [vmem:[%s163 + $0x78] sm:$0xff] %vm2111, %v2094
        %2128 = vst.msk [vmem:[%s163 + $0x80] sm:$0xff] %vm2111, %v2095
        %2129 = vst.msk [vmem:[%s163 + $0x88] sm:$0xff] %vm2111, %v2096
        %2130 = vst.msk [vmem:[%s163 + $0x90] sm:$0xff] %vm2111, %v2097
        %2131 = vst.msk [vmem:[%s163 + $0x98] sm:$0xff] %vm2111, %v2098
        %2132 = vst.msk [vmem:[%s163 + $0xa0] sm:$0xff] %vm2111, %v2099
        %2133 = vst.msk [vmem:[%s163 + $0xa8] sm:$0xff] %vm2111, %v2100
        %2134 = vst.msk [vmem:[%s163 + $0xb0] sm:$0xff] %vm2111, %v2101
        %2135 = vst.msk [vmem:[%s163 + $0xb8] sm:$0xff] %vm2111, %v2102
        %2136 = vst.msk [vmem:[%s163 + $0xc0] sm:$0xff] %vm2111, %v2103
        %2137 = vst.msk [vmem:[%s163 + $0xc8] sm:$0xff] %vm2111, %v2104
        %2138 = vst.msk [vmem:[%s163 + $0xd0] sm:$0xff] %vm2111, %v2105
        %2139 = vst.msk [vmem:[%s163 + $0xd8] sm:$0xff] %vm2111, %v2106
        %2140 = vst.msk [vmem:[%s163 + $0xe0] sm:$0xff] %vm2111, %v2107
        %2141 = vst.msk [vmem:[%s163 + $0xe8] sm:$0xff] %vm2111, %v2108
        %2142 = vst.msk [vmem:[%s163 + $0xf0] sm:$0xff] %vm2111, %v2109
        %2143 = vst.msk [vmem:[%s163 + $0xf8] sm:$0xff] %vm2111, %v2110
        %s2144 = sand.u32 %s93, 1
        %s2145 = scalar_lea.sflag [#allocation3], %s2144
        %s2146 = sand.u32 %s93, 1
        %s2147 = smul.addr %s2146, 256
        %s2148 = scalar_lea.vmem [#allocation2], %s2147
        // Predicated region
        $region33: #{bilin_conv_upsampling.1} parent=31 // pred_check
          %p2149 = pneg %p103
        $region34: #{bilin_conv_upsampling.1} parent=31 // pred_check_branch
          %2151 = sbr.rel (%p2149) target = $region36
        $region35: #{bilin_conv_upsampling.1} parent=31 // pred_region
          %s2153 = ssub.s32 4096, 4096
          %2154 = vsyncadd %s2145, %s2153
          %s2155 = smul.addr %s17, 32
          %s2156 = smul.addr %s2155, 128
          %s2157 = scalar_lea.hbm %s3, %s2156
          %s2158 = sshll.u32 %s2148, 4
          %s2159 = int_to_ptr.vmem [resolvable:$true] %s2158
          %2164 = dma.vmem_to_hbm [thread:$0]  %s2159, 4096, %s2157, %s2145, 128, 128, 8
        $region36: #{bilin_conv_upsampling.1} parent=31 // pred_fallthru
          _
      $region32: #{bilin_conv_upsampling.1} parent=5 // pred_fallthru
        _
      %p2165 = scmp.le.s32.totalorder 2, %s12
      // Predicated region
      $region37: #{bilin_conv_upsampling.1} parent=5 // pred_check
        %p2166 = pneg %p2165
      $region38: #{bilin_conv_upsampling.1} parent=5 // pred_check_branch
        %2168 = sbr.rel (%p2166) target = $region40
      $region39: #{bilin_conv_upsampling.1} parent=5 // pred_region
        %s2169 = ssub.s32 %s12, 2
        // Predicated region
        $region41: #{bilin_conv_upsampling.1} parent=39 // pred_check
          %p2170 = pneg %p109
        $region42: #{bilin_conv_upsampling.1} parent=39 // pred_check_branch
          %2172 = sbr.rel (%p2170) target = $region44
        $region43: #{bilin_conv_upsampling.1} parent=39 // pred_region
          %s2173 = sand.u32 %s94, 1
          %s2174 = scalar_lea.sflag [#allocation3], %s2173
          %s2175 = sand.u32 %s94, 1
          %s2176 = smul.addr %s2175, 256
          %s2177 = scalar_lea.vmem [#allocation2], %s2176
          %2178 = dma.done %s2174, 4096
        $region44: #{bilin_conv_upsampling.1} parent=39 // pred_fallthru
          _
      $region40: #{bilin_conv_upsampling.1} parent=5 // pred_fallthru
        _
    $region6: #{bilin_conv_upsampling.1} parent=1 // loop_footer
      %s16 = sadd.s32 1, %s12
    $region7: #{bilin_conv_upsampling.1} parent=1 // loop_footer_branch
      %11 = sbr.rel target = $region3
    $region8: #{bilin_conv_upsampling.1} parent=1 // loop_exit
      _
    %2179 = vsyncpa [#allocation3], 1
    %s2180 = scalar_lea.sflag [#allocation3], 1
    %2181 = vsyncpa %s2180, 1

</llo_original>
